<compile_context>
chip_gen: v6e
topology: v6e:2x2x1
jax: 0.10.0
libtpu: 0.0.40
codegen_flags: <defaults>
</compile_context>

<pallas_src>
import jax
import jax.numpy as jnp
from jax import lax
from jax.experimental import pallas as pl
from jax.experimental.pallas import tpu as pltpu

HIDDEN = 256
_EPS = 1e-12


def _normalize(v, eps=_EPS):
    # torch.nn.functional.normalize: v / max(||v||, eps)
    return v / jnp.maximum(jnp.linalg.norm(v), eps)


# -----------------------------------------------------------------------------
# Kernel
# -----------------------------------------------------------------------------
def _disc_kernel(x_ref, w1_ref, b1_ref, w2_ref, u_ref, sc_ref,
                 o_ref, wwu_out_ref, acc_ref, wwu_ref):
    """Grid: (batch blocks [parallel], K tiles of D [arbitrary reduction])."""
    k = pl.program_id(1)

    @pl.when(k == 0)
    def _():
        acc_ref[...] = jnp.zeros_like(acc_ref)
        wwu_ref[...] = jnp.zeros_like(wwu_ref)

    w1t = w1_ref[...]                                    # (HIDDEN, tk) bf16
    xt = x_ref[...].astype(jnp.bfloat16)                 # (bm, tk)

    # Layer 1: x @ W1^T, contracting dim 1 of both (native torch weight
    # layout, MXU transposed-RHS orientation), f32 accumulation.
    acc_ref[...] += lax.dot_general(
        xt, w1t, dimension_numbers=(((1,), (1,)), ((), ())),
        preferred_element_type=jnp.float32)

    # Fused spectral-norm power iteration for W1 (same single pass over W1).
    # u is padded to 8 rows (rows 1..7 zero) so the MXU sees standard shapes.
    ut = lax.dot_general(                                # (8, tk) ~ W^T u
        u_ref[...], w1t, dimension_numbers=(((1,), (0,)), ((), ())),
        preferred_element_type=jnp.float32)
    wwu_ref[...] += lax.dot_general(                     # (8, HIDDEN) ~ W W^T u
        ut.astype(jnp.bfloat16), w1t,
        dimension_numbers=(((1,), (1,)), ((), ())),
        preferred_element_type=jnp.float32)

    @pl.when(k == pl.num_programs(1) - 1)
    def _():
        wwu = wwu_ref[...]                               # (8, HIDDEN); rows 1..7 are 0
        u_f32 = u_ref[...].astype(jnp.float32)
        # ||W^T u||^2 = u^T (W W^T u);  sigma1 = ||W W^T u|| / ||W^T u|| = ||W v||.
        utwwu = jnp.sum(u_f32 * wwu, keepdims=True)              # (1, 1)
        nrm_wtu = jnp.sqrt(jnp.maximum(utwwu, 0.0))
        nrm_wwu = jnp.sqrt(jnp.sum(wwu * wwu, keepdims=True))
        inv_s1 = nrm_wtu / jnp.maximum(nrm_wwu, _EPS)            # = 1 / sigma1

        h = acc_ref[...] * inv_s1 + b1_ref[...]                  # spectral Linear1
        h = jnp.where(h > 0, h, 0.2 * h)                         # LeakyReLU(0.2)
        # Layer 2 (256 -> 1): VPU multiply + lane reduction; w2 is pre-scaled
        # by 1/sigma2 in the wrapper, b2 arrives as an SMEM scalar.
        y = jnp.sum(h * w2_ref[...], axis=-1, keepdims=True) + sc_ref[0]
        o_ref[...] = (1.0 / (1.0 + jnp.exp(-y))).astype(o_ref.dtype)  # Sigmoid

        wwu_out_ref[...] = wwu       # lets the wrapper update u1 (torch buffer)


# -----------------------------------------------------------------------------
# Tiling helpers (generation-aware VMEM budget)
# -----------------------------------------------------------------------------
def _physical_vmem_bytes():
    try:
        info = pltpu.get_tpu_info()
        for name in ("vmem_capacity_bytes", "vmem_size_bytes", "vmem_bytes"):
            v = getattr(info, name, None)
            if v:
                return int(v)
    except Exception:
        pass
    return 64 * 1024 * 1024          # v7x has the smallest physical VMEM


def _footprint_bytes(bm, tk):
    """Rough VMEM footprint for one (bm, tk) step (bf16 W1, f32 x/acc)."""
    xtile = bm * tk * 4              # f32 x tile
    wtile = HIDDEN * tk * 2          # bf16 W1 tile
    temps = bm * tk * 2 + 8 * tk * 6         # in-kernel bf16(x), W^T u partials
    fixed = (bm * HIDDEN * 4                 # f32 layer-1 accumulator
             + 8 * HIDDEN * 4 * 3            # W W^T u scratch + output buffers
             + 3 * HIDDEN * 4 * 2            # b1 / scaled-w2 / u residents
             + bm * 4 * 2)                   # (bm, 1) output tile
    return 2 * (xtile + wtile) + temps + fixed + (2 << 20)   # 2 MiB slack


def _choose_tk(D, bm, budget_bytes):
    cands = sorted({t for t in range(128, D, 128) if D % t == 0} | {D})
    best = cands[0]                  # smallest legal tile is the fallback
    for t in cands:
        if _footprint_bytes(bm, t) <= budget_bytes:
            best = max(best, t)
    return best


# -----------------------------------------------------------------------------
# Parameter packing (do ONCE at init/load time, not per forward)
# -----------------------------------------------------------------------------
def prepare_params(w1, b1, w2, b2):
    """W1 is stored in bf16 so the dominant HBM stream is halved per call."""
    return dict(
        w1=w1.astype(jnp.bfloat16),                        # (HIDDEN, D)
        b1=jnp.reshape(b1, (1, HIDDEN)).astype(jnp.float32),
        w2=jnp.reshape(w2, (1, HIDDEN)).astype(jnp.float32),
        b2=jnp.reshape(b2, (1,)).astype(jnp.float32),
    )


# -----------------------------------------------------------------------------
# Forward wrapper
# -----------------------------------------------------------------------------
def discriminator_forward(x, params, u1, u2, *, tk=None, bm=None):
    """x: (B, D) f32.  Returns (probs (B, 1), u1_new, u2_new) so the caller can
    carry the spectral-norm power-iteration buffers exactly like torch does."""
    B, D = x.shape
    w1, b1, w2, b2 = params["w1"], params["b1"], params["w2"], params["b2"]
    assert w1.shape == (HIDDEN, D) and w1.dtype == jnp.bfloat16

    if bm is None:
        # Keep bm == B: with the batch axis outer every batch block re-streams
        # all of W1, so splitting only pays off once B >> HIDDEN.
        bm = B
    assert B % bm == 0 and (bm == B or bm % 8 == 0), (B, bm)

    phys_vmem = _physical_vmem_bytes()
    budget = min(phys_vmem // 2, 40 * 1024 * 1024)
    if tk is None:
        tk = _choose_tk(D, bm, budget)
    assert D % tk == 0, f"K tile {tk} must divide D={D}"

    # --- Layer-2 spectral norm (tiny (1, 256) weight): plain-JAX glue -------
    v2 = _normalize(w2.T @ u2)                  # (HIDDEN,)
    w2v = w2 @ v2                               # (1,)
    sigma2 = jnp.maximum(jnp.linalg.norm(w2v), _EPS)
    u2_new = w2v / sigma2                       # normalize(W2 v2)
    w2_scaled = w2 / sigma2                     # fold 1/sigma2 (256 floats)

    # --- Layer-1 spectral-norm inputs (the heavy part runs in-kernel) -------
    u1_pad = jnp.zeros((8, HIDDEN), jnp.bfloat16).at[0].set(
        u1.astype(jnp.bfloat16))
    scalars = b2                                # (1,) f32 -> SMEM

    n_bm = B // bm
    grid = (n_bm, D // tk)

    probs, wwu = pl.pallas_call(
        _disc_kernel,
        out_shape=(
            jax.ShapeDtypeStruct((B, 1), jnp.float32),
            jax.ShapeDtypeStruct((8 * n_bm, HIDDEN), jnp.float32),
        ),
        grid_spec=pltpu.PrefetchScalarGridSpec(
            num_scalar_prefetch=0,
            grid=grid,
            in_specs=[
                pl.BlockSpec((bm, tk), lambda i, k: (i, k)),        # x tile
                pl.BlockSpec((HIDDEN, tk), lambda i, k: (0, k)),    # W1 bf16 (native layout)
                pl.BlockSpec((1, HIDDEN), lambda i, k: (0, 0)),     # b1 (resident)
                pl.BlockSpec((1, HIDDEN), lambda i, k: (0, 0)),     # W2 / sigma2 (resident)
                pl.BlockSpec((8, HIDDEN), lambda i, k: (0, 0)),     # u1 padded (resident)
                pl.BlockSpec(memory_space=pltpu.MemorySpace.SMEM),  # [b2]
            ],
            out_specs=[
                pl.BlockSpec((bm, 1), lambda i, k: (i, 0)),
                pl.BlockSpec((8, HIDDEN), lambda i, k: (i, 0)),
            ],
            scratch_shapes=[
                pltpu.VMEM((bm, HIDDEN), jnp.float32),   # layer-1 accumulator
                pltpu.VMEM((8, HIDDEN), jnp.float32),    # W W^T u accumulator
            ],
        ),
        compiler_params=pltpu.CompilerParams(
            dimension_semantics=("parallel", "arbitrary"),
            vmem_limit_bytes=int(min(phys_vmem * 3 // 4, 112 * 1024 * 1024)),
        ),
    )(x, w1, b1, w2_scaled, u1_pad, scalars)

    # torch-style buffer update: u1 <- normalize(W1 v1) (direction of W W^T u).
    wwu0 = wwu[0]
    u1_new = wwu0 / jnp.maximum(jnp.linalg.norm(wwu0), _EPS)
    return probs, u1_new, u2_new


# -----------------------------------------------------------------------------
# Pure-JAX reference (mirrors the torch module) for correctness checks
# -----------------------------------------------------------------------------
def spectral_sigma_ref(w, u):
    v = _normalize(w.T @ u)
    u_new = _normalize(w @ v)
    sigma = u_new @ (w @ v)
    return sigma, u_new


def discriminator_ref(x, w1, b1, w2, b2, u1, u2):
    s1, u1n = spectral_sigma_ref(w1, u1)
    s2, u2n = spectral_sigma_ref(w2, u2)
    h = x @ (w1 / s1).T + b1
    h = jnp.where(h > 0, h, 0.2 * h)
    y = h @ (w2 / s2).T + b2
    return jax.nn.sigmoid(y), u1n, u2n


if __name__ == "__main__":
    # Small but module-consistent shapes (true FEAT_DIM = 128*125 = 16000;
    # input_dim is a constructor argument, so a small D is used for the demo).
    B, D = 16, 2048

    key = jax.random.PRNGKey(0)
    kx, kw1, kb1, kw2, kb2, ku1, ku2 = jax.random.split(key, 7)

    x = jax.random.normal(kx, (B, D), dtype=jnp.float32)

    lim1 = 1.0 / jnp.sqrt(D)
    w1 = jax.random.uniform(kw1, (HIDDEN, D), minval=-lim1, maxval=lim1,
                            dtype=jnp.float32)
    b1 = jax.random.uniform(kb1, (HIDDEN,), minval=-lim1, maxval=lim1,
                            dtype=jnp.float32)
    lim2 = 1.0 / jnp.sqrt(HIDDEN)
    w2 = jax.random.uniform(kw2, (1, HIDDEN), minval=-lim2, maxval=lim2,
                            dtype=jnp.float32)
    b2 = jax.random.uniform(kb2, (1,), minval=-lim2, maxval=lim2,
                            dtype=jnp.float32)

    # spectral-norm power-iteration vectors (registered buffers in PyTorch)
    u1 = jax.random.normal(ku1, (HIDDEN,), dtype=jnp.float32)
    u2 = jax.random.normal(ku2, (1,), dtype=jnp.float32)

    params = prepare_params(w1, b1, w2, b2)   # W1 -> bf16 once, at "init" time

    # References: exact f32 module, and the same math with the bf16-rounded W1
    # (isolates the intentional storage-precision change from kernel errors).
    ref_f32, _, _ = discriminator_ref(x, w1, b1, w2, b2, u1, u2)
    w1_bf = params["w1"].astype(jnp.float32)
    ref_bf16w, u1_ref, u2_ref = discriminator_ref(x, w1_bf, b1, w2, b2, u1, u2)

    # 1) default path: auto K tile (single K step here), bm = B
    out, u1_new, u2_new = discriminator_forward(x, params, u1, u2)
    out = jax.block_until_ready(out)
    assert out.shape == (B, 1), out.shape
    err_bf = float(jnp.max(jnp.abs(out - ref_bf16w)))
    assert err_bf < 5e-3, f"max err vs bf16-weight reference: {err_bf}"
    err_f32 = float(jnp.max(jnp.abs(out - ref_f32)))
    assert err_f32 < 3e-2, f"max err vs exact f32 module: {err_f32}"
    # Updated power-iteration buffers must follow torch's update rule.
    assert float(jnp.max(jnp.abs(u1_new - u1_ref))) < 5e-3
    assert float(jnp.max(jnp.abs(u2_new - u2_ref))) < 1e-5

    # 2) multi-step K reduction + batch-block axis (exercises the accumulator
    #    loop and the megacore-friendly grid)
    out2, _, _ = discriminator_forward(x, params, u1, u2, tk=512, bm=8)
    out2 = jax.block_until_ready(out2)
    err2 = float(jnp.max(jnp.abs(out2 - ref_bf16w)))
    assert err2 < 5e-3, f"max err (tk=512, bm=8): {err2}"

    print("KERNEL_OK")
</pallas_src>

<mosaic_0001>
module attributes {stable_mosaic.version = 11 : i64} {
  func.func @_disc_kernel(%arg0: i32, %arg1: i32, %arg2: memref<16x2048xf32, #tpu.memory_space<vmem>>, %arg3: memref<256x2048xbf16, #tpu.memory_space<vmem>>, %arg4: memref<1x256xf32, #tpu.memory_space<vmem>>, %arg5: memref<1x256xf32, #tpu.memory_space<vmem>>, %arg6: memref<8x256xbf16, #tpu.memory_space<vmem>>, %arg7: memref<1xf32, #tpu.memory_space<smem>>, %arg8: memref<16x1xf32, #tpu.memory_space<vmem>>, %arg9: memref<8x256xf32, #tpu.memory_space<vmem>>, %arg10: memref<16x256xf32, #tpu.memory_space<vmem>>, %arg11: memref<8x256xf32, #tpu.memory_space<vmem>>) attributes {dimension_semantics = [#tpu.dimension_semantics<parallel>, #tpu.dimension_semantics<arbitrary>], iteration_bounds = array<i64: 1, 1>, scalar_prefetch = 0 : i64, scratch_operands = 2 : i64, tpu.core_type = #tpu.core_type<tc>, window_params = [{transform_indices = @transform_0, window_bounds = array<i64: 16, 2048>}, {transform_indices = @transform_1, window_bounds = array<i64: 256, 2048>}, {pipeline_mode = #tpu.pipeline_mode<synchronous>, transform_indices = @transform_2, window_bounds = array<i64: 1, 256>}, {pipeline_mode = #tpu.pipeline_mode<synchronous>, transform_indices = @transform_3, window_bounds = array<i64: 1, 256>}, {pipeline_mode = #tpu.pipeline_mode<synchronous>, transform_indices = @transform_4, window_bounds = array<i64: 8, 256>}, {transform_indices = @transform_5, window_bounds = array<i64: 1>}, {transform_indices = @transform_6, window_bounds = array<i64: 16, 1>}, {transform_indices = @transform_7, window_bounds = array<i64: 8, 256>}]} {
    %c0_i32 = arith.constant 0 : i32
    %0 = arith.cmpi eq, %arg1, %c0_i32 : i32
    %1 = arith.extui %0 : i1 to i32
    %c0_i32_0 = arith.constant 0 : i32
    %2 = arith.cmpi ne, %1, %c0_i32_0 : i32
    scf.if %2 {
      %cst_18 = arith.constant 0.000000e+00 : f32
      %20 = vector.broadcast %cst_18 : f32 to vector<16x256xf32>
      %c0_19 = arith.constant 0 : index
      %c0_20 = arith.constant 0 : index
      %21 = vector.load %arg10[%c0_19, %c0_20] : memref<16x256xf32, #tpu.memory_space<vmem>>, vector<16x256xf32>
      tpu.vector_store %arg10[%c0_19, %c0_20], %20 {strides = array<i32>} : memref<16x256xf32, #tpu.memory_space<vmem>>, vector<16x256xf32>,
      %cst_21 = arith.constant 0.000000e+00 : f32
      %22 = vector.broadcast %cst_21 : f32 to vector<8x256xf32>
      %c0_22 = arith.constant 0 : index
      %c0_23 = arith.constant 0 : index
      %23 = vector.load %arg11[%c0_22, %c0_23] : memref<8x256xf32, #tpu.memory_space<vmem>>, vector<8x256xf32>
      tpu.vector_store %arg11[%c0_22, %c0_23], %22 {strides = array<i32>} : memref<8x256xf32, #tpu.memory_space<vmem>>, vector<8x256xf32>,
    } else {
    }
    %c0 = arith.constant 0 : index
    %c0_1 = arith.constant 0 : index
    %3 = vector.load %arg3[%c0, %c0_1] : memref<256x2048xbf16, #tpu.memory_space<vmem>>, vector<256x2048xbf16>
    %c0_2 = arith.constant 0 : index
    %c0_3 = arith.constant 0 : index
    %4 = vector.load %arg2[%c0_2, %c0_3] : memref<16x2048xf32, #tpu.memory_space<vmem>>, vector<16x2048xf32>
    %5 = arith.truncf %4 : vector<16x2048xf32> to vector<16x2048xbf16>
    %c0_4 = arith.constant 0 : index
    %c0_5 = arith.constant 0 : index
    %6 = vector.load %arg10[%c0_4, %c0_5] : memref<16x256xf32, #tpu.memory_space<vmem>>, vector<16x256xf32>
    %cst = arith.constant dense<0.000000e+00> : vector<16x256xf32>
    %7 = tpu.matmul %5, %3, %cst {dimension_numbers = #tpu.dot_dimension_numbers<[1], [1], [0], [0], [0, 0, 1, 0], [], []>} : vector<16x2048xbf16>, vector<256x2048xbf16>, vector<16x256xf32> -> vector<16x256xf32>
    %8 = arith.addf %6, %7 : vector<16x256xf32>
    %c0_6 = arith.constant 0 : index
    %c0_7 = arith.constant 0 : index
    %9 = vector.load %arg10[%c0_6, %c0_7] : memref<16x256xf32, #tpu.memory_space<vmem>>, vector<16x256xf32>
    tpu.vector_store %arg10[%c0_6, %c0_7], %8 {strides = array<i32>} : memref<16x256xf32, #tpu.memory_space<vmem>>, vector<16x256xf32>,
    %c0_8 = arith.constant 0 : index
    %c0_9 = arith.constant 0 : index
    %10 = vector.load %arg6[%c0_8, %c0_9] : memref<8x256xbf16, #tpu.memory_space<vmem>>, vector<8x256xbf16>
    %cst_10 = arith.constant dense<0.000000e+00> : vector<8x2048xf32>
    %11 = tpu.matmul %10, %3, %cst_10 {dimension_numbers = #tpu.dot_dimension_numbers<[1], [0], [0], [1], [0, 0, 1, 1], [], []>} : vector<8x256xbf16>, vector<256x2048xbf16>, vector<8x2048xf32> -> vector<8x2048xf32>
    %c0_11 = arith.constant 0 : index
    %c0_12 = arith.constant 0 : index
    %12 = vector.load %arg11[%c0_11, %c0_12] : memref<8x256xf32, #tpu.memory_space<vmem>>, vector<8x256xf32>
    %13 = arith.truncf %11 : vector<8x2048xf32> to vector<8x2048xbf16>
    %cst_13 = arith.constant dense<0.000000e+00> : vector<8x256xf32>
    %14 = tpu.matmul %13, %3, %cst_13 {dimension_numbers = #tpu.dot_dimension_numbers<[1], [1], [0], [0], [0, 0, 1, 0], [], []>} : vector<8x2048xbf16>, vector<256x2048xbf16>, vector<8x256xf32> -> vector<8x256xf32>
    %15 = arith.addf %12, %14 : vector<8x256xf32>
    %c0_14 = arith.constant 0 : index
    %c0_15 = arith.constant 0 : index
    %16 = vector.load %arg11[%c0_14, %c0_15] : memref<8x256xf32, #tpu.memory_space<vmem>>, vector<8x256xf32>
    tpu.vector_store %arg11[%c0_14, %c0_15], %15 {strides = array<i32>} : memref<8x256xf32, #tpu.memory_space<vmem>>, vector<8x256xf32>,
    %c0_i32_16 = arith.constant 0 : i32
    %17 = arith.cmpi eq, %arg1, %c0_i32_16 : i32
    %18 = arith.extui %17 : i1 to i32
    %c0_i32_17 = arith.constant 0 : i32
    %19 = arith.cmpi ne, %18, %c0_i32_17 : i32
    scf.if %19 {
      %c0_18 = arith.constant 0 : index
      %c0_19 = arith.constant 0 : index
      %20 = vector.load %arg11[%c0_18, %c0_19] : memref<8x256xf32, #tpu.memory_space<vmem>>, vector<8x256xf32>
      %c0_20 = arith.constant 0 : index
      %c0_21 = arith.constant 0 : index
      %21 = vector.load %arg6[%c0_20, %c0_21] : memref<8x256xbf16, #tpu.memory_space<vmem>>, vector<8x256xbf16>
      %22 = arith.extf %21 : vector<8x256xbf16> to vector<8x256xf32>
      %23 = arith.mulf %22, %20 : vector<8x256xf32>
      %24 = vector.shape_cast %23 : vector<8x256xf32> to vector<1x8x256xf32>
      %cst_22 = arith.constant dense<0.000000e+00> : vector<1xf32>
      %25 = vector.multi_reduction <add>, %24, %cst_22 [1, 2] : vector<1x8x256xf32> to vector<1xf32>
      %26 = vector.shape_cast %25 : vector<1xf32> to vector<1x1x1xf32>
      %27 = vector.extract %26[0, 0, 0] : f32 from vector<1x1x1xf32>
      %28 = vector.broadcast %27 : f32 to vector<1x1xf32>
      %cst_23 = arith.constant 0.000000e+00 : f32
      %29 = vector.broadcast %cst_23 : f32 to vector<1x1xf32>
      %30 = arith.maximumf %28, %29 : vector<1x1xf32>
      %31 = math.sqrt %30 : vector<1x1xf32>
      %32 = arith.mulf %20, %20 : vector<8x256xf32>
      %33 = vector.shape_cast %32 : vector<8x256xf32> to vector<1x8x256xf32>
      %cst_24 = arith.constant dense<0.000000e+00> : vector<1xf32>
      %34 = vector.multi_reduction <add>, %33, %cst_24 [1, 2] : vector<1x8x256xf32> to vector<1xf32>
      %35 = vector.shape_cast %34 : vector<1xf32> to vector<1x1x1xf32>
      %36 = vector.extract %35[0, 0, 0] : f32 from vector<1x1x1xf32>
      %37 = vector.broadcast %36 : f32 to vector<1x1xf32>
      %38 = math.sqrt %37 : vector<1x1xf32>
      %cst_25 = arith.constant 9.99999996E-13 : f32
      %39 = vector.broadcast %cst_25 : f32 to vector<1x1xf32>
      %40 = arith.maximumf %38, %39 : vector<1x1xf32>
      %41 = arith.divf %31, %40 : vector<1x1xf32>
      %c0_26 = arith.constant 0 : index
      %c0_27 = arith.constant 0 : index
      %42 = vector.load %arg10[%c0_26, %c0_27] : memref<16x256xf32, #tpu.memory_space<vmem>>, vector<16x256xf32>
      %43 = vector.broadcast %41 : vector<1x1xf32> to vector<16x256xf32>
      %44 = arith.mulf %42, %43 : vector<16x256xf32>
      %c0_28 = arith.constant 0 : index
      %c0_29 = arith.constant 0 : index
      %45 = vector.load %arg4[%c0_28, %c0_29] : memref<1x256xf32, #tpu.memory_space<vmem>>, vector<1x256xf32>
      %46 = vector.broadcast %45 : vector<1x256xf32> to vector<16x256xf32>
      %47 = arith.addf %44, %46 : vector<16x256xf32>
      %cst_30 = arith.constant 0.000000e+00 : f32
      %48 = vector.broadcast %cst_30 : f32 to vector<16x256xf32>
      %49 = arith.cmpf ogt, %47, %48 : vector<16x256xf32>
      %cst_31 = arith.constant 2.000000e-01 : f32
      %50 = vector.broadcast %cst_31 : f32 to vector<16x256xf32>
      %51 = arith.mulf %50, %47 : vector<16x256xf32>
      %52 = arith.select %49, %47, %51 : vector<16x256xi1>, vector<16x256xf32>
      %c0_32 = arith.constant 0 : index
      %c0_33 = arith.constant 0 : index
      %53 = vector.load %arg5[%c0_32, %c0_33] : memref<1x256xf32, #tpu.memory_space<vmem>>, vector<1x256xf32>
      %54 = vector.broadcast %53 : vector<1x256xf32> to vector<16x256xf32>
      %55 = arith.mulf %52, %54 : vector<16x256xf32>
      %cst_34 = arith.constant dense<0.000000e+00> : vector<16xf32>
      %56 = vector.multi_reduction <add>, %55, %cst_34 [1] : vector<16x256xf32> to vector<16xf32>
      %57 = vector.shape_cast %56 : vector<16xf32> to vector<16x1xf32>
      %c0_35 = arith.constant 0 : index
      %58 = memref.load %arg7[%c0_35] : memref<1xf32, #tpu.memory_space<smem>>
      %59 = vector.broadcast %58 : f32 to vector<16x1xf32>
      %60 = arith.addf %57, %59 : vector<16x1xf32>
      %cst_36 = arith.constant 0.000000e+00 : f32
      %61 = vector.broadcast %cst_36 : f32 to vector<16x1xf32>
      %62 = arith.subf %61, %60 : vector<16x1xf32>
      %63 = math.exp %62 : vector<16x1xf32>
      %cst_37 = arith.constant 1.000000e+00 : f32
      %64 = vector.broadcast %cst_37 : f32 to vector<16x1xf32>
      %65 = arith.addf %64, %63 : vector<16x1xf32>
      %cst_38 = arith.constant 1.000000e+00 : f32
      %66 = vector.broadcast %cst_38 : f32 to vector<16x1xf32>
      %67 = arith.divf %66, %65 : vector<16x1xf32>
      %c0_39 = arith.constant 0 : index
      %c0_40 = arith.constant 0 : index
      %68 = vector.load %arg8[%c0_39, %c0_40] : memref<16x1xf32, #tpu.memory_space<vmem>>, vector<16x1xf32>
      tpu.vector_store %arg8[%c0_39, %c0_40], %67 {strides = array<i32>} : memref<16x1xf32, #tpu.memory_space<vmem>>, vector<16x1xf32>,
      %c0_41 = arith.constant 0 : index
      %c0_42 = arith.constant 0 : index
      %69 = vector.load %arg9[%c0_41, %c0_42] : memref<8x256xf32, #tpu.memory_space<vmem>>, vector<8x256xf32>
      tpu.vector_store %arg9[%c0_41, %c0_42], %20 {strides = array<i32>} : memref<8x256xf32, #tpu.memory_space<vmem>>, vector<8x256xf32>,
    } else {
    }
    return
  }
  func.func @transform_0(%arg0: i32, %arg1: i32) -> (i32, i32) {
    %c0_i32 = arith.constant 0 : i32
    return %arg0, %arg1 : i32, i32
  }
  func.func @transform_1(%arg0: i32, %arg1: i32) -> (i32, i32) {
    %c0_i32 = arith.constant 0 : i32
    %c0_i32_0 = arith.constant 0 : i32
    return %c0_i32, %arg1 : i32, i32
  }
  func.func @transform_2(%arg0: i32, %arg1: i32) -> (i32, i32) {
    %c0_i32 = arith.constant 0 : i32
    %c0_i32_0 = arith.constant 0 : i32
    %c0_i32_1 = arith.constant 0 : i32
    return %c0_i32, %c0_i32_0 : i32, i32
  }
  func.func @transform_3(%arg0: i32, %arg1: i32) -> (i32, i32) {
    %c0_i32 = arith.constant 0 : i32
    %c0_i32_0 = arith.constant 0 : i32
    %c0_i32_1 = arith.constant 0 : i32
    return %c0_i32, %c0_i32_0 : i32, i32
  }
  func.func @transform_4(%arg0: i32, %arg1: i32) -> (i32, i32) {
    %c0_i32 = arith.constant 0 : i32
    %c0_i32_0 = arith.constant 0 : i32
    %c0_i32_1 = arith.constant 0 : i32
    return %c0_i32, %c0_i32_0 : i32, i32
  }
  func.func @transform_5(%arg0: i32, %arg1: i32) -> i32 {
    %c0_i32 = arith.constant 0 : i32
    %c0_i32_0 = arith.constant 0 : i32
    return %c0_i32 : i32
  }
  func.func @transform_6(%arg0: i32, %arg1: i32) -> (i32, i32) {
    %c0_i32 = arith.constant 0 : i32
    %c0_i32_0 = arith.constant 0 : i32
    return %arg0, %c0_i32 : i32, i32
  }
  func.func @transform_7(%arg0: i32, %arg1: i32) -> (i32, i32) {
    %c0_i32 = arith.constant 0 : i32
    %c0_i32_0 = arith.constant 0 : i32
    return %arg0, %c0_i32 : i32, i32
  }
}

</mosaic_0001>

<llo_original>
// kernel: tpu_custom_call.1
$region0: #{tpu_custom_call.1}
  #allocation0 [shape = 'u32[]', space=smem, size = 0x4, offset = 0x4, fixed_abs, tag = 'smem constant byte address 0x4 - core index']
  #allocation1 [shape = 'u32[144,128]{1,0:T(1,128)}', space=vmem, size = 0x12000, scoped, tag = 'internal scratch']
  #allocation2 [shape = 'f32[16,256]{1,0:T(8,128)}', space=vmem, size = 0x4000, scoped, tag = 'scratch operand']
  #allocation3 [shape = 'f32[8,256]{1,0:T(8,128)}', space=vmem, size = 0x2000, scoped, tag = 'scratch operand']
  #allocation4 [shape = 'f32[1]{0:T(128)S(6)}', space=smem, size = 0x200, scoped, tag = 'scoped memory for tpu_custom_call.1']
  %s0 = inlined_call_operand.hbm [shape: f32[16,2048], index: 0, kind: input, shape index: {}]
  %s1 = inlined_call_operand.hbm [shape: bf16[256,2048], index: 1, kind: input, shape index: {}]
  %s2 = inlined_call_operand.hbm [shape: f32[1,256], index: 2, kind: input, shape index: {}]
  %s3 = inlined_call_operand.hbm [shape: f32[1,256], index: 3, kind: input, shape index: {}]
  %s4 = inlined_call_operand.vmem [shape: bf16[8,256], index: 4, kind: input, shape index: {}]
  %s5 = inlined_call_operand.<no memory space> [shape: f32[1], index: 5, kind: input, shape index: {}]
  %s6 = inlined_call_operand.vmem [shape: f32[16,1], index: 6, kind: output, shape index: {0}]
  %s7 = inlined_call_operand.hbm [shape: f32[8,256], index: 7, kind: output, shape index: {1}]
  %8 = xla_tuple %s6, %s7
  %s9 = sld [smem:[#allocation0]]
  $region66: #{tpu_custom_call.1} parent=0
    _
  %s11 = ssub.s32 1, %s9
  %s12 = scalar_select 0, %s11, %s9
  %13 = sst [smem:[#allocation4]] %s5
  $region1: #{tpu_custom_call.1} parent=0
    #allocation5 [shape = 'u8[131072]{0}', space=vmem, size = 0x20000, scoped, tag = 'input window, operand 0, single buffered']
    #allocation6 [shape = 's32[1]{0}', space=sflag, size = 0x4, scoped, tag = 'scoped memory for tpu_custom_call.1']
    #allocation7 [shape = 's32[1]{0}', space=sflag, size = 0x4, scoped, tag = 'scoped memory for tpu_custom_call.1']
    #allocation8 [shape = 'u8[1048576]{0}', space=vmem, size = 0x100000, scoped, tag = 'input window, operand 1, single buffered']
    #allocation9 [shape = 's32[1]{0}', space=sflag, size = 0x4, scoped, tag = 'scoped memory for tpu_custom_call.1']
    #allocation10 [shape = 'u8[1024]{0}', space=vmem, size = 0x400, scoped, tag = 'input window, operand 2, single buffered']
    #allocation11 [shape = 'u8[1024]{0}', space=vmem, size = 0x400, scoped, tag = 'input window, operand 3, single buffered']
    #allocation12 [shape = 's32[1]{0}', space=sflag, size = 0x4, scoped, tag = 'scoped memory for tpu_custom_call.1']
    #allocation13 [shape = 'u8[8192]{0}', space=vmem, size = 0x2000, scoped, tag = 'output window, operand 1, single buffered']
    %14 = vsyncpa [#allocation6], 0
    %15 = vsyncpa [#allocation9], 0
    %16 = vsyncpa [#allocation12], 0
    %17 = vsyncpa [#allocation7], 0
    // Predicated region
    $region2: #{tpu_custom_call.1} parent=1 // pred_check
      _
    $region3: #{tpu_custom_call.1} parent=1 // pred_check_branch
      %19 = sbr.rel (0) target = $region5
    $region4: #{tpu_custom_call.1} parent=1 // pred_region
      %s21 = ssub.s32 4096, 4096
      %22 = vsyncadd [#allocation6], %s21
      %s23 = sshll.u32 [#allocation5], 4
      %s24 = int_to_ptr.vmem [resolvable:$true] %s23
      %29 = dma.hbm_to_vmem [thread:$0]  %s0, 4096, %s24, [#allocation6], 2048, 2048, 128
    $region5: #{tpu_custom_call.1} parent=1 // pred_fallthru
      _
    // Predicated region
    $region6: #{tpu_custom_call.1} parent=1 // pred_check
      _
    $region7: #{tpu_custom_call.1} parent=1 // pred_check_branch
      %31 = sbr.rel (0) target = $region9
    $region8: #{tpu_custom_call.1} parent=1 // pred_region
      %s33 = ssub.s32 32768, 32768
      %34 = vsyncadd [#allocation9], %s33
      %s35 = sshll.u32 [#allocation8], 4
      %s36 = int_to_ptr.vmem [resolvable:$true] %s35
      %41 = dma.hbm_to_vmem [thread:$0]  %s1, 32768, %s36, [#allocation9], 1024, 1024, 64
    $region9: #{tpu_custom_call.1} parent=1 // pred_fallthru
      _
    // Predicated region
    $region10: #{tpu_custom_call.1} parent=1 // pred_check
      _
    $region11: #{tpu_custom_call.1} parent=1 // pred_check_branch
      %43 = sbr.rel (0) target = $region13
    $region12: #{tpu_custom_call.1} parent=1 // pred_region
      %s45 = ssub.s32 32, 32
      %46 = vsyncadd [#allocation9], %s45
      %s48 = sshll.u32 [#allocation10], 4
      %s49 = int_to_ptr.vmem [resolvable:$true] %s48
      %51 = dma.hbm_to_vmem [thread:$0]  %s2, 32, %s49, [#allocation9]
    $region13: #{tpu_custom_call.1} parent=1 // pred_fallthru
      _
    // Predicated region
    $region14: #{tpu_custom_call.1} parent=1 // pred_check
      _
    $region15: #{tpu_custom_call.1} parent=1 // pred_check_branch
      %53 = sbr.rel (0) target = $region17
    $region16: #{tpu_custom_call.1} parent=1 // pred_region
      %s55 = ssub.s32 32, 32
      %56 = vsyncadd [#allocation12], %s55
      %s58 = sshll.u32 [#allocation11], 4
      %s59 = int_to_ptr.vmem [resolvable:$true] %s58
      %61 = dma.hbm_to_vmem [thread:$0]  %s3, 32, %s59, [#allocation12]
    $region17: #{tpu_custom_call.1} parent=1 // pred_fallthru
      _
    // Predicated region
    $region18: #{tpu_custom_call.1} parent=1 // pred_check
      _
    $region19: #{tpu_custom_call.1} parent=1 // pred_check_branch
      %63 = sbr.rel (0) target = $region21
    $region20: #{tpu_custom_call.1} parent=1 // pred_region
      _
    $region21: #{tpu_custom_call.1} parent=1 // pred_fallthru
      _
    // Predicated region
    $region22: #{tpu_custom_call.1} parent=1 // pred_check
      _
    $region23: #{tpu_custom_call.1} parent=1 // pred_check_branch
      %65 = sbr.rel (0) target = $region25
    $region24: #{tpu_custom_call.1} parent=1 // pred_region
      _
    $region25: #{tpu_custom_call.1} parent=1 // pred_fallthru
      _
    // Predicated region
    $region26: #{tpu_custom_call.1} parent=1 // pred_check
      _
    $region27: #{tpu_custom_call.1} parent=1 // pred_check_branch
      %67 = sbr.rel (0) target = $region29
    $region28: #{tpu_custom_call.1} parent=1 // pred_region
      %68 = dma.done [#allocation6], 4096
    $region29: #{tpu_custom_call.1} parent=1 // pred_fallthru
      _
    // Predicated region
    $region30: #{tpu_custom_call.1} parent=1 // pred_check
      _
    $region31: #{tpu_custom_call.1} parent=1 // pred_check_branch
      %70 = sbr.rel (0) target = $region33
    $region32: #{tpu_custom_call.1} parent=1 // pred_region
      %71 = dma.done [#allocation9], 32768
    $region33: #{tpu_custom_call.1} parent=1 // pred_fallthru
      _
    // Predicated region
    $region34: #{tpu_custom_call.1} parent=1 // pred_check
      _
    $region35: #{tpu_custom_call.1} parent=1 // pred_check_branch
      %73 = sbr.rel (0) target = $region37
    $region36: #{tpu_custom_call.1} parent=1 // pred_region
      %74 = dma.done [#allocation9], 32
    $region37: #{tpu_custom_call.1} parent=1 // pred_fallthru
      _
    // Predicated region
    $region38: #{tpu_custom_call.1} parent=1 // pred_check
      _
    $region39: #{tpu_custom_call.1} parent=1 // pred_check_branch
      %76 = sbr.rel (0) target = $region41
    $region40: #{tpu_custom_call.1} parent=1 // pred_region
      %77 = dma.done [#allocation12], 32
    $region41: #{tpu_custom_call.1} parent=1 // pred_fallthru
      _
    %p78 = scmp.eq.s32.totalorder 0, 0
    // Predicated region
    $region42: #{tpu_custom_call.1} parent=1 // pred_check
      %p79 = pneg %p78
    $region43: #{tpu_custom_call.1} parent=1 // pred_check_branch
      %81 = sbr.rel (%p79) target = $region45
    $region44: #{tpu_custom_call.1} parent=1 // pred_region
      %82 = vst [vmem:[#allocation2] sm:$0xff] 0.0
      %83 = vst [vmem:[#allocation2 + $0x8] sm:$0xff] 0.0
      %84 = vst [vmem:[#allocation2 + $0x10] sm:$0xff] 0.0
      %85 = vst [vmem:[#allocation2 + $0x18] sm:$0xff] 0.0
      %86 = vst [vmem:[#allocation3] sm:$0xff] 0.0
      %87 = vst [vmem:[#allocation3 + $0x8] sm:$0xff] 0.0
    $region45: #{tpu_custom_call.1} parent=1 // pred_fallthru
      _
    %v88 = vld [vmem:[#allocation8] sm:$0xff]
    %v89 = vld [vmem:[#allocation8 + $0x8] sm:$0xff]
    %v90 = vld [vmem:[#allocation8 + $0x10] sm:$0xff]
    %v91 = vld [vmem:[#allocation8 + $0x18] sm:$0xff]
    %v92 = vld [vmem:[#allocation8 + $0x20] sm:$0xff]
    %v93 = vld [vmem:[#allocation8 + $0x28] sm:$0xff]
    %v94 = vld [vmem:[#allocation8 + $0x30] sm:$0xff]
    %v95 = vld [vmem:[#allocation8 + $0x38] sm:$0xff]
    %v96 = vld [vmem:[#allocation8 + $0x40] sm:$0xff]
    %v97 = vld [vmem:[#allocation8 + $0x48] sm:$0xff]
    %v98 = vld [vmem:[#allocation8 + $0x50] sm:$0xff]
    %v99 = vld [vmem:[#allocation8 + $0x58] sm:$0xff]
    %v100 = vld [vmem:[#allocation8 + $0x60] sm:$0xff]
    %v101 = vld [vmem:[#allocation8 + $0x68] sm:$0xff]
    %v102 = vld [vmem:[#allocation8 + $0x70] sm:$0xff]
    %v103 = vld [vmem:[#allocation8 + $0x78] sm:$0xff]
    %v104 = vld [vmem:[#allocation8 + $0x80] sm:$0xff]
    %v105 = vld [vmem:[#allocation8 + $0x88] sm:$0xff]
    %v106 = vld [vmem:[#allocation8 + $0x90] sm:$0xff]
    %v107 = vld [vmem:[#allocation8 + $0x98] sm:$0xff]
    %v108 = vld [vmem:[#allocation8 + $0xa0] sm:$0xff]
    %v109 = vld [vmem:[#allocation8 + $0xa8] sm:$0xff]
    %v110 = vld [vmem:[#allocation8 + $0xb0] sm:$0xff]
    %v111 = vld [vmem:[#allocation8 + $0xb8] sm:$0xff]
    %v112 = vld [vmem:[#allocation8 + $0xc0] sm:$0xff]
    %v113 = vld [vmem:[#allocation8 + $0xc8] sm:$0xff]
    %v114 = vld [vmem:[#allocation8 + $0xd0] sm:$0xff]
    %v115 = vld [vmem:[#allocation8 + $0xd8] sm:$0xff]
    %v116 = vld [vmem:[#allocation8 + $0xe0] sm:$0xff]
    %v117 = vld [vmem:[#allocation8 + $0xe8] sm:$0xff]
    %v118 = vld [vmem:[#allocation8 + $0xf0] sm:$0xff]
    %v119 = vld [vmem:[#allocation8 + $0xf8] sm:$0xff]
    %v120 = vld [vmem:[#allocation8 + $0x100] sm:$0xff]
    %v121 = vld [vmem:[#allocation8 + $0x108] sm:$0xff]
    %v122 = vld [vmem:[#allocation8 + $0x110] sm:$0xff]
    %v123 = vld [vmem:[#allocation8 + $0x118] sm:$0xff]
    %v124 = vld [vmem:[#allocation8 + $0x120] sm:$0xff]
    %v125 = vld [vmem:[#allocation8 + $0x128] sm:$0xff]
    %v126 = vld [vmem:[#allocation8 + $0x130] sm:$0xff]
    %v127 = vld [vmem:[#allocation8 + $0x138] sm:$0xff]
    %v128 = vld [vmem:[#allocation8 + $0x140] sm:$0xff]
    %v129 = vld [vmem:[#allocation8 + $0x148] sm:$0xff]
    %v130 = vld [vmem:[#allocation8 + $0x150] sm:$0xff]
    %v131 = vld [vmem:[#allocation8 + $0x158] sm:$0xff]
    %v132 = vld [vmem:[#allocation8 + $0x160] sm:$0xff]
    %v133 = vld [vmem:[#allocation8 + $0x168] sm:$0xff]
    %v134 = vld [vmem:[#allocation8 + $0x170] sm:$0xff]
    %v135 = vld [vmem:[#allocation8 + $0x178] sm:$0xff]
    %v136 = vld [vmem:[#allocation8 + $0x180] sm:$0xff]
    %v137 = vld [vmem:[#allocation8 + $0x188] sm:$0xff]
    %v138 = vld [vmem:[#allocation8 + $0x190] sm:$0xff]
    %v139 = vld [vmem:[#allocation8 + $0x198] sm:$0xff]
    %v140 = vld [vmem:[#allocation8 + $0x1a0] sm:$0xff]
    %v141 = vld [vmem:[#allocation8 + $0x1a8] sm:$0xff]
    %v142 = vld [vmem:[#allocation8 + $0x1b0] sm:$0xff]
    %v143 = vld [vmem:[#allocation8 + $0x1b8] sm:$0xff]
    %v144 = vld [vmem:[#allocation8 + $0x1c0] sm:$0xff]
    %v145 = vld [vmem:[#allocation8 + $0x1c8] sm:$0xff]
    %v146 = vld [vmem:[#allocation8 + $0x1d0] sm:$0xff]
    %v147 = vld [vmem:[#allocation8 + $0x1d8] sm:$0xff]
    %v148 = vld [vmem:[#allocation8 + $0x1e0] sm:$0xff]
    %v149 = vld [vmem:[#allocation8 + $0x1e8] sm:$0xff]
    %v150 = vld [vmem:[#allocation8 + $0x1f0] sm:$0xff]
    %v151 = vld [vmem:[#allocation8 + $0x1f8] sm:$0xff]
    %v152 = vld [vmem:[#allocation8 + $0x200] sm:$0xff]
    %v153 = vld [vmem:[#allocation8 + $0x208] sm:$0xff]
    %v154 = vld [vmem:[#allocation8 + $0x210] sm:$0xff]
    %v155 = vld [vmem:[#allocation8 + $0x218] sm:$0xff]
    %v156 = vld [vmem:[#allocation8 + $0x220] sm:$0xff]
    %v157 = vld [vmem:[#allocation8 + $0x228] sm:$0xff]
    %v158 = vld [vmem:[#allocation8 + $0x230] sm:$0xff]
    %v159 = vld [vmem:[#allocation8 + $0x238] sm:$0xff]
    %v160 = vld [vmem:[#allocation8 + $0x240] sm:$0xff]
    %v161 = vld [vmem:[#allocation8 + $0x248] sm:$0xff]
    %v162 = vld [vmem:[#allocation8 + $0x250] sm:$0xff]
    %v163 = vld [vmem:[#allocation8 + $0x258] sm:$0xff]
    %v164 = vld [vmem:[#allocation8 + $0x260] sm:$0xff]
    %v165 = vld [vmem:[#allocation8 + $0x268] sm:$0xff]
    %v166 = vld [vmem:[#allocation8 + $0x270] sm:$0xff]
    %v167 = vld [vmem:[#allocation8 + $0x278] sm:$0xff]
    %v168 = vld [vmem:[#allocation8 + $0x280] sm:$0xff]
    %v169 = vld [vmem:[#allocation8 + $0x288] sm:$0xff]
    %v170 = vld [vmem:[#allocation8 + $0x290] sm:$0xff]
    %v171 = vld [vmem:[#allocation8 + $0x298] sm:$0xff]
    %v172 = vld [vmem:[#allocation8 + $0x2a0] sm:$0xff]
    %v173 = vld [vmem:[#allocation8 + $0x2a8] sm:$0xff]
    %v174 = vld [vmem:[#allocation8 + $0x2b0] sm:$0xff]
    %v175 = vld [vmem:[#allocation8 + $0x2b8] sm:$0xff]
    %v176 = vld [vmem:[#allocation8 + $0x2c0] sm:$0xff]
    %v177 = vld [vmem:[#allocation8 + $0x2c8] sm:$0xff]
    %v178 = vld [vmem:[#allocation8 + $0x2d0] sm:$0xff]
    %v179 = vld [vmem:[#allocation8 + $0x2d8] sm:$0xff]
    %v180 = vld [vmem:[#allocation8 + $0x2e0] sm:$0xff]
    %v181 = vld [vmem:[#allocation8 + $0x2e8] sm:$0xff]
    %v182 = vld [vmem:[#allocation8 + $0x2f0] sm:$0xff]
    %v183 = vld [vmem:[#allocation8 + $0x2f8] sm:$0xff]
    %v184 = vld [vmem:[#allocation8 + $0x300] sm:$0xff]
    %v185 = vld [vmem:[#allocation8 + $0x308] sm:$0xff]
    %v186 = vld [vmem:[#allocation8 + $0x310] sm:$0xff]
    %v187 = vld [vmem:[#allocation8 + $0x318] sm:$0xff]
    %v188 = vld [vmem:[#allocation8 + $0x320] sm:$0xff]
    %v189 = vld [vmem:[#allocation8 + $0x328] sm:$0xff]
    %v190 = vld [vmem:[#allocation8 + $0x330] sm:$0xff]
    %v191 = vld [vmem:[#allocation8 + $0x338] sm:$0xff]
    %v192 = vld [vmem:[#allocation8 + $0x340] sm:$0xff]
    %v193 = vld [vmem:[#allocation8 + $0x348] sm:$0xff]
    %v194 = vld [vmem:[#allocation8 + $0x350] sm:$0xff]
    %v195 = vld [vmem:[#allocation8 + $0x358] sm:$0xff]
    %v196 = vld [vmem:[#allocation8 + $0x360] sm:$0xff]
    %v197 = vld [vmem:[#allocation8 + $0x368] sm:$0xff]
    %v198 = vld [vmem:[#allocation8 + $0x370] sm:$0xff]
    %v199 = vld [vmem:[#allocation8 + $0x378] sm:$0xff]
    %v200 = vld [vmem:[#allocation8 + $0x380] sm:$0xff]
    %v201 = vld [vmem:[#allocation8 + $0x388] sm:$0xff]
    %v202 = vld [vmem:[#allocation8 + $0x390] sm:$0xff]
    %v203 = vld [vmem:[#allocation8 + $0x398] sm:$0xff]
    %v204 = vld [vmem:[#allocation8 + $0x3a0] sm:$0xff]
    %v205 = vld [vmem:[#allocation8 + $0x3a8] sm:$0xff]
    %v206 = vld [vmem:[#allocation8 + $0x3b0] sm:$0xff]
    %v207 = vld [vmem:[#allocation8 + $0x3b8] sm:$0xff]
    %v208 = vld [vmem:[#allocation8 + $0x3c0] sm:$0xff]
    %v209 = vld [vmem:[#allocation8 + $0x3c8] sm:$0xff]
    %v210 = vld [vmem:[#allocation8 + $0x3d0] sm:$0xff]
    %v211 = vld [vmem:[#allocation8 + $0x3d8] sm:$0xff]
    %v212 = vld [vmem:[#allocation8 + $0x3e0] sm:$0xff]
    %v213 = vld [vmem:[#allocation8 + $0x3e8] sm:$0xff]
    %v214 = vld [vmem:[#allocation8 + $0x3f0] sm:$0xff]
    %v215 = vld [vmem:[#allocation8 + $0x3f8] sm:$0xff]
    %v216 = vld [vmem:[#allocation8 + $0x400] sm:$0xff]
    %v217 = vld [vmem:[#allocation8 + $0x408] sm:$0xff]
    %v218 = vld [vmem:[#allocation8 + $0x410] sm:$0xff]
    %v219 = vld [vmem:[#allocation8 + $0x418] sm:$0xff]
    %v220 = vld [vmem:[#allocation8 + $0x420] sm:$0xff]
    %v221 = vld [vmem:[#allocation8 + $0x428] sm:$0xff]
    %v222 = vld [vmem:[#allocation8 + $0x430] sm:$0xff]
    %v223 = vld [vmem:[#allocation8 + $0x438] sm:$0xff]
    %v224 = vld [vmem:[#allocation8 + $0x440] sm:$0xff]
    %v225 = vld [vmem:[#allocation8 + $0x448] sm:$0xff]
    %v226 = vld [vmem:[#allocation8 + $0x450] sm:$0xff]
    %v227 = vld [vmem:[#allocation8 + $0x458] sm:$0xff]
    %v228 = vld [vmem:[#allocation8 + $0x460] sm:$0xff]
    %v229 = vld [vmem:[#allocation8 + $0x468] sm:$0xff]
    %v230 = vld [vmem:[#allocation8 + $0x470] sm:$0xff]
    %v231 = vld [vmem:[#allocation8 + $0x478] sm:$0xff]
    %v232 = vld [vmem:[#allocation8 + $0x480] sm:$0xff]
    %v233 = vld [vmem:[#allocation8 + $0x488] sm:$0xff]
    %v234 = vld [vmem:[#allocation8 + $0x490] sm:$0xff]
    %v235 = vld [vmem:[#allocation8 + $0x498] sm:$0xff]
    %v236 = vld [vmem:[#allocation8 + $0x4a0] sm:$0xff]
    %v237 = vld [vmem:[#allocation8 + $0x4a8] sm:$0xff]
    %v238 = vld [vmem:[#allocation8 + $0x4b0] sm:$0xff]
    %v239 = vld [vmem:[#allocation8 + $0x4b8] sm:$0xff]
    %v240 = vld [vmem:[#allocation8 + $0x4c0] sm:$0xff]
    %v241 = vld [vmem:[#allocation8 + $0x4c8] sm:$0xff]
    %v242 = vld [vmem:[#allocation8 + $0x4d0] sm:$0xff]
    %v243 = vld [vmem:[#allocation8 + $0x4d8] sm:$0xff]
    %v244 = vld [vmem:[#allocation8 + $0x4e0] sm:$0xff]
    %v245 = vld [vmem:[#allocation8 + $0x4e8] sm:$0xff]
    %v246 = vld [vmem:[#allocation8 + $0x4f0] sm:$0xff]
    %v247 = vld [vmem:[#allocation8 + $0x4f8] sm:$0xff]
    %v248 = vld [vmem:[#allocation8 + $0x500] sm:$0xff]
    %v249 = vld [vmem:[#allocation8 + $0x508] sm:$0xff]
    %v250 = vld [vmem:[#allocation8 + $0x510] sm:$0xff]
    %v251 = vld [vmem:[#allocation8 + $0x518] sm:$0xff]
    %v252 = vld [vmem:[#allocation8 + $0x520] sm:$0xff]
    %v253 = vld [vmem:[#allocation8 + $0x528] sm:$0xff]
    %v254 = vld [vmem:[#allocation8 + $0x530] sm:$0xff]
    %v255 = vld [vmem:[#allocation8 + $0x538] sm:$0xff]
    %v256 = vld [vmem:[#allocation8 + $0x540] sm:$0xff]
    %v257 = vld [vmem:[#allocation8 + $0x548] sm:$0xff]
    %v258 = vld [vmem:[#allocation8 + $0x550] sm:$0xff]
    %v259 = vld [vmem:[#allocation8 + $0x558] sm:$0xff]
    %v260 = vld [vmem:[#allocation8 + $0x560] sm:$0xff]
    %v261 = vld [vmem:[#allocation8 + $0x568] sm:$0xff]
    %v262 = vld [vmem:[#allocation8 + $0x570] sm:$0xff]
    %v263 = vld [vmem:[#allocation8 + $0x578] sm:$0xff]
    %v264 = vld [vmem:[#allocation8 + $0x580] sm:$0xff]
    %v265 = vld [vmem:[#allocation8 + $0x588] sm:$0xff]
    %v266 = vld [vmem:[#allocation8 + $0x590] sm:$0xff]
    %v267 = vld [vmem:[#allocation8 + $0x598] sm:$0xff]
    %v268 = vld [vmem:[#allocation8 + $0x5a0] sm:$0xff]
    %v269 = vld [vmem:[#allocation8 + $0x5a8] sm:$0xff]
    %v270 = vld [vmem:[#allocation8 + $0x5b0] sm:$0xff]
    %v271 = vld [vmem:[#allocation8 + $0x5b8] sm:$0xff]
    %v272 = vld [vmem:[#allocation8 + $0x5c0] sm:$0xff]
    %v273 = vld [vmem:[#allocation8 + $0x5c8] sm:$0xff]
    %v274 = vld [vmem:[#allocation8 + $0x5d0] sm:$0xff]
    %v275 = vld [vmem:[#allocation8 + $0x5d8] sm:$0xff]
    %v276 = vld [vmem:[#allocation8 + $0x5e0] sm:$0xff]
    %v277 = vld [vmem:[#allocation8 + $0x5e8] sm:$0xff]
    %v278 = vld [vmem:[#allocation8 + $0x5f0] sm:$0xff]
    %v279 = vld [vmem:[#allocation8 + $0x5f8] sm:$0xff]
    %v280 = vld [vmem:[#allocation8 + $0x600] sm:$0xff]
    %v281 = vld [vmem:[#allocation8 + $0x608] sm:$0xff]
    %v282 = vld [vmem:[#allocation8 + $0x610] sm:$0xff]
    %v283 = vld [vmem:[#allocation8 + $0x618] sm:$0xff]
    %v284 = vld [vmem:[#allocation8 + $0x620] sm:$0xff]
    %v285 = vld [vmem:[#allocation8 + $0x628] sm:$0xff]
    %v286 = vld [vmem:[#allocation8 + $0x630] sm:$0xff]
    %v287 = vld [vmem:[#allocation8 + $0x638] sm:$0xff]
    %v288 = vld [vmem:[#allocation8 + $0x640] sm:$0xff]
    %v289 = vld [vmem:[#allocation8 + $0x648] sm:$0xff]
    %v290 = vld [vmem:[#allocation8 + $0x650] sm:$0xff]
    %v291 = vld [vmem:[#allocation8 + $0x658] sm:$0xff]
    %v292 = vld [vmem:[#allocation8 + $0x660] sm:$0xff]
    %v293 = vld [vmem:[#allocation8 + $0x668] sm:$0xff]
    %v294 = vld [vmem:[#allocation8 + $0x670] sm:$0xff]
    %v295 = vld [vmem:[#allocation8 + $0x678] sm:$0xff]
    %v296 = vld [vmem:[#allocation8 + $0x680] sm:$0xff]
    %v297 = vld [vmem:[#allocation8 + $0x688] sm:$0xff]
    %v298 = vld [vmem:[#allocation8 + $0x690] sm:$0xff]
    %v299 = vld [vmem:[#allocation8 + $0x698] sm:$0xff]
    %v300 = vld [vmem:[#allocation8 + $0x6a0] sm:$0xff]
    %v301 = vld [vmem:[#allocation8 + $0x6a8] sm:$0xff]
    %v302 = vld [vmem:[#allocation8 + $0x6b0] sm:$0xff]
    %v303 = vld [vmem:[#allocation8 + $0x6b8] sm:$0xff]
    %v304 = vld [vmem:[#allocation8 + $0x6c0] sm:$0xff]
    %v305 = vld [vmem:[#allocation8 + $0x6c8] sm:$0xff]
    %v306 = vld [vmem:[#allocation8 + $0x6d0] sm:$0xff]
    %v307 = vld [vmem:[#allocation8 + $0x6d8] sm:$0xff]
    %v308 = vld [vmem:[#allocation8 + $0x6e0] sm:$0xff]
    %v309 = vld [vmem:[#allocation8 + $0x6e8] sm:$0xff]
    %v310 = vld [vmem:[#allocation8 + $0x6f0] sm:$0xff]
    %v311 = vld [vmem:[#allocation8 + $0x6f8] sm:$0xff]
    %v312 = vld [vmem:[#allocation8 + $0x700] sm:$0xff]
    %v313 = vld [vmem:[#allocation8 + $0x708] sm:$0xff]
    %v314 = vld [vmem:[#allocation8 + $0x710] sm:$0xff]
    %v315 = vld [vmem:[#allocation8 + $0x718] sm:$0xff]
    %v316 = vld [vmem:[#allocation8 + $0x720] sm:$0xff]
    %v317 = vld [vmem:[#allocation8 + $0x728] sm:$0xff]
    %v318 = vld [vmem:[#allocation8 + $0x730] sm:$0xff]
    %v319 = vld [vmem:[#allocation8 + $0x738] sm:$0xff]
    %v320 = vld [vmem:[#allocation8 + $0x740] sm:$0xff]
    %v321 = vld [vmem:[#allocation8 + $0x748] sm:$0xff]
    %v322 = vld [vmem:[#allocation8 + $0x750] sm:$0xff]
    %v323 = vld [vmem:[#allocation8 + $0x758] sm:$0xff]
    %v324 = vld [vmem:[#allocation8 + $0x760] sm:$0xff]
    %v325 = vld [vmem:[#allocation8 + $0x768] sm:$0xff]
    %v326 = vld [vmem:[#allocation8 + $0x770] sm:$0xff]
    %v327 = vld [vmem:[#allocation8 + $0x778] sm:$0xff]
    %v328 = vld [vmem:[#allocation8 + $0x780] sm:$0xff]
    %v329 = vld [vmem:[#allocation8 + $0x788] sm:$0xff]
    %v330 = vld [vmem:[#allocation8 + $0x790] sm:$0xff]
    %v331 = vld [vmem:[#allocation8 + $0x798] sm:$0xff]
    %v332 = vld [vmem:[#allocation8 + $0x7a0] sm:$0xff]
    %v333 = vld [vmem:[#allocation8 + $0x7a8] sm:$0xff]
    %v334 = vld [vmem:[#allocation8 + $0x7b0] sm:$0xff]
    %v335 = vld [vmem:[#allocation8 + $0x7b8] sm:$0xff]
    %v336 = vld [vmem:[#allocation8 + $0x7c0] sm:$0xff]
    %v337 = vld [vmem:[#allocation8 + $0x7c8] sm:$0xff]
    %v338 = vld [vmem:[#allocation8 + $0x7d0] sm:$0xff]
    %v339 = vld [vmem:[#allocation8 + $0x7d8] sm:$0xff]
    %v340 = vld [vmem:[#allocation8 + $0x7e0] sm:$0xff]
    %v341 = vld [vmem:[#allocation8 + $0x7e8] sm:$0xff]
    %v342 = vld [vmem:[#allocation8 + $0x7f0] sm:$0xff]
    %v343 = vld [vmem:[#allocation8 + $0x7f8] sm:$0xff]
    %v344 = vld [vmem:[#allocation5] sm:$0xff]
    %v345 = vld [vmem:[#allocation5 + $0x8] sm:$0xff]
    %v346 = vld [vmem:[#allocation5 + $0x10] sm:$0xff]
    %v347 = vld [vmem:[#allocation5 + $0x18] sm:$0xff]
    %v348 = vld [vmem:[#allocation5 + $0x20] sm:$0xff]
    %v349 = vld [vmem:[#allocation5 + $0x28] sm:$0xff]
    %v350 = vld [vmem:[#allocation5 + $0x30] sm:$0xff]
    %v351 = vld [vmem:[#allocation5 + $0x38] sm:$0xff]
    %v352 = vld [vmem:[#allocation5 + $0x40] sm:$0xff]
    %v353 = vld [vmem:[#allocation5 + $0x48] sm:$0xff]
    %v354 = vld [vmem:[#allocation5 + $0x50] sm:$0xff]
    %v355 = vld [vmem:[#allocation5 + $0x58] sm:$0xff]
    %v356 = vld [vmem:[#allocation5 + $0x60] sm:$0xff]
    %v357 = vld [vmem:[#allocation5 + $0x68] sm:$0xff]
    %v358 = vld [vmem:[#allocation5 + $0x70] sm:$0xff]
    %v359 = vld [vmem:[#allocation5 + $0x78] sm:$0xff]
    %v360 = vld [vmem:[#allocation5 + $0x80] sm:$0xff]
    %v361 = vld [vmem:[#allocation5 + $0x88] sm:$0xff]
    %v362 = vld [vmem:[#allocation5 + $0x90] sm:$0xff]
    %v363 = vld [vmem:[#allocation5 + $0x98] sm:$0xff]
    %v364 = vld [vmem:[#allocation5 + $0xa0] sm:$0xff]
    %v365 = vld [vmem:[#allocation5 + $0xa8] sm:$0xff]
    %v366 = vld [vmem:[#allocation5 + $0xb0] sm:$0xff]
    %v367 = vld [vmem:[#allocation5 + $0xb8] sm:$0xff]
    %v368 = vld [vmem:[#allocation5 + $0xc0] sm:$0xff]
    %v369 = vld [vmem:[#allocation5 + $0xc8] sm:$0xff]
    %v370 = vld [vmem:[#allocation5 + $0xd0] sm:$0xff]
    %v371 = vld [vmem:[#allocation5 + $0xd8] sm:$0xff]
    %v372 = vld [vmem:[#allocation5 + $0xe0] sm:$0xff]
    %v373 = vld [vmem:[#allocation5 + $0xe8] sm:$0xff]
    %v374 = vld [vmem:[#allocation5 + $0xf0] sm:$0xff]
    %v375 = vld [vmem:[#allocation5 + $0xf8] sm:$0xff]
    %v376 = vpack.c.bf16 %v360, %v344
    %v377 = vpack.c.bf16 %v361, %v345
    %v378 = vpack.c.bf16 %v362, %v346
    %v379 = vpack.c.bf16 %v363, %v347
    %v380 = vpack.c.bf16 %v364, %v348
    %v381 = vpack.c.bf16 %v365, %v349
    %v382 = vpack.c.bf16 %v366, %v350
    %v383 = vpack.c.bf16 %v367, %v351
    %v384 = vpack.c.bf16 %v368, %v352
    %v385 = vpack.c.bf16 %v369, %v353
    %v386 = vpack.c.bf16 %v370, %v354
    %v387 = vpack.c.bf16 %v371, %v355
    %v388 = vpack.c.bf16 %v372, %v356
    %v389 = vpack.c.bf16 %v373, %v357
    %v390 = vpack.c.bf16 %v374, %v358
    %v391 = vpack.c.bf16 %v375, %v359
    %v392 = vld [vmem:[#allocation2] sm:$0xff]
    %v393 = vld [vmem:[#allocation2 + $0x8] sm:$0xff]
    %v394 = vld [vmem:[#allocation2 + $0x10] sm:$0xff]
    %v395 = vld [vmem:[#allocation2 + $0x18] sm:$0xff]
    %v652 = vunpack.c.l.b16 %v88
    %v653 = vunpack.c.h.b16 %v88
    %v654 = vunpack.c.l.b16 %v89
    %v655 = vunpack.c.h.b16 %v89
    %v656 = vunpack.c.l.b16 %v90
    %v657 = vunpack.c.h.b16 %v90
    %v658 = vunpack.c.l.b16 %v91
    %v659 = vunpack.c.h.b16 %v91
    %v660 = vunpack.c.l.b16 %v92
    %v661 = vunpack.c.h.b16 %v92
    %v662 = vunpack.c.l.b16 %v93
    %v663 = vunpack.c.h.b16 %v93
    %v664 = vunpack.c.l.b16 %v94
    %v665 = vunpack.c.h.b16 %v94
    %v666 = vunpack.c.l.b16 %v95
    %v667 = vunpack.c.h.b16 %v95
    %v668 = vunpack.c.l.b16 %v96
    %v669 = vunpack.c.h.b16 %v96
    %v670 = vunpack.c.l.b16 %v97
    %v671 = vunpack.c.h.b16 %v97
    %v672 = vunpack.c.l.b16 %v98
    %v673 = vunpack.c.h.b16 %v98
    %v674 = vunpack.c.l.b16 %v99
    %v675 = vunpack.c.h.b16 %v99
    %v676 = vunpack.c.l.b16 %v100
    %v677 = vunpack.c.h.b16 %v100
    %v678 = vunpack.c.l.b16 %v101
    %v679 = vunpack.c.h.b16 %v101
    %v680 = vunpack.c.l.b16 %v102
    %v681 = vunpack.c.h.b16 %v102
    %v682 = vunpack.c.l.b16 %v103
    %v683 = vunpack.c.h.b16 %v103
    %v684 = vunpack.c.l.b16 %v104
    %v685 = vunpack.c.h.b16 %v104
    %v686 = vunpack.c.l.b16 %v105
    %v687 = vunpack.c.h.b16 %v105
    %v688 = vunpack.c.l.b16 %v106
    %v689 = vunpack.c.h.b16 %v106
    %v690 = vunpack.c.l.b16 %v107
    %v691 = vunpack.c.h.b16 %v107
    %v692 = vunpack.c.l.b16 %v108
    %v693 = vunpack.c.h.b16 %v108
    %v694 = vunpack.c.l.b16 %v109
    %v695 = vunpack.c.h.b16 %v109
    %v696 = vunpack.c.l.b16 %v110
    %v697 = vunpack.c.h.b16 %v110
    %v698 = vunpack.c.l.b16 %v111
    %v699 = vunpack.c.h.b16 %v111
    %v700 = vunpack.c.l.b16 %v112
    %v701 = vunpack.c.h.b16 %v112
    %v702 = vunpack.c.l.b16 %v113
    %v703 = vunpack.c.h.b16 %v113
    %v704 = vunpack.c.l.b16 %v114
    %v705 = vunpack.c.h.b16 %v114
    %v706 = vunpack.c.l.b16 %v115
    %v707 = vunpack.c.h.b16 %v115
    %v708 = vunpack.c.l.b16 %v116
    %v709 = vunpack.c.h.b16 %v116
    %v710 = vunpack.c.l.b16 %v117
    %v711 = vunpack.c.h.b16 %v117
    %v712 = vunpack.c.l.b16 %v118
    %v713 = vunpack.c.h.b16 %v118
    %v714 = vunpack.c.l.b16 %v119
    %v715 = vunpack.c.h.b16 %v119
    %v716 = vunpack.c.l.b16 %v120
    %v717 = vunpack.c.h.b16 %v120
    %v718 = vunpack.c.l.b16 %v121
    %v719 = vunpack.c.h.b16 %v121
    %v720 = vunpack.c.l.b16 %v122
    %v721 = vunpack.c.h.b16 %v122
    %v722 = vunpack.c.l.b16 %v123
    %v723 = vunpack.c.h.b16 %v123
    %v724 = vunpack.c.l.b16 %v124
    %v725 = vunpack.c.h.b16 %v124
    %v726 = vunpack.c.l.b16 %v125
    %v727 = vunpack.c.h.b16 %v125
    %v728 = vunpack.c.l.b16 %v126
    %v729 = vunpack.c.h.b16 %v126
    %v730 = vunpack.c.l.b16 %v127
    %v731 = vunpack.c.h.b16 %v127
    %v732 = vunpack.c.l.b16 %v128
    %v733 = vunpack.c.h.b16 %v128
    %v734 = vunpack.c.l.b16 %v129
    %v735 = vunpack.c.h.b16 %v129
    %v736 = vunpack.c.l.b16 %v130
    %v737 = vunpack.c.h.b16 %v130
    %v738 = vunpack.c.l.b16 %v131
    %v739 = vunpack.c.h.b16 %v131
    %v740 = vunpack.c.l.b16 %v132
    %v741 = vunpack.c.h.b16 %v132
    %v742 = vunpack.c.l.b16 %v133
    %v743 = vunpack.c.h.b16 %v133
    %v744 = vunpack.c.l.b16 %v134
    %v745 = vunpack.c.h.b16 %v134
    %v746 = vunpack.c.l.b16 %v135
    %v747 = vunpack.c.h.b16 %v135
    %v748 = vunpack.c.l.b16 %v136
    %v749 = vunpack.c.h.b16 %v136
    %v750 = vunpack.c.l.b16 %v137
    %v751 = vunpack.c.h.b16 %v137
    %v752 = vunpack.c.l.b16 %v138
    %v753 = vunpack.c.h.b16 %v138
    %v754 = vunpack.c.l.b16 %v139
    %v755 = vunpack.c.h.b16 %v139
    %v756 = vunpack.c.l.b16 %v140
    %v757 = vunpack.c.h.b16 %v140
    %v758 = vunpack.c.l.b16 %v141
    %v759 = vunpack.c.h.b16 %v141
    %v760 = vunpack.c.l.b16 %v142
    %v761 = vunpack.c.h.b16 %v142
    %v762 = vunpack.c.l.b16 %v143
    %v763 = vunpack.c.h.b16 %v143
    %v764 = vunpack.c.l.b16 %v144
    %v765 = vunpack.c.h.b16 %v144
    %v766 = vunpack.c.l.b16 %v145
    %v767 = vunpack.c.h.b16 %v145
    %v768 = vunpack.c.l.b16 %v146
    %v769 = vunpack.c.h.b16 %v146
    %v770 = vunpack.c.l.b16 %v147
    %v771 = vunpack.c.h.b16 %v147
    %v772 = vunpack.c.l.b16 %v148
    %v773 = vunpack.c.h.b16 %v148
    %v774 = vunpack.c.l.b16 %v149
    %v775 = vunpack.c.h.b16 %v149
    %v776 = vunpack.c.l.b16 %v150
    %v777 = vunpack.c.h.b16 %v150
    %v778 = vunpack.c.l.b16 %v151
    %v779 = vunpack.c.h.b16 %v151
    %v780 = vunpack.c.l.b16 %v152
    %v781 = vunpack.c.h.b16 %v152
    %v782 = vunpack.c.l.b16 %v153
    %v783 = vunpack.c.h.b16 %v153
    %v784 = vunpack.c.l.b16 %v154
    %v785 = vunpack.c.h.b16 %v154
    %v786 = vunpack.c.l.b16 %v155
    %v787 = vunpack.c.h.b16 %v155
    %v788 = vunpack.c.l.b16 %v156
    %v789 = vunpack.c.h.b16 %v156
    %v790 = vunpack.c.l.b16 %v157
    %v791 = vunpack.c.h.b16 %v157
    %v792 = vunpack.c.l.b16 %v158
    %v793 = vunpack.c.h.b16 %v158
    %v794 = vunpack.c.l.b16 %v159
    %v795 = vunpack.c.h.b16 %v159
    %v796 = vunpack.c.l.b16 %v160
    %v797 = vunpack.c.h.b16 %v160
    %v798 = vunpack.c.l.b16 %v161
    %v799 = vunpack.c.h.b16 %v161
    %v800 = vunpack.c.l.b16 %v162
    %v801 = vunpack.c.h.b16 %v162
    %v802 = vunpack.c.l.b16 %v163
    %v803 = vunpack.c.h.b16 %v163
    %v804 = vunpack.c.l.b16 %v164
    %v805 = vunpack.c.h.b16 %v164
    %v806 = vunpack.c.l.b16 %v165
    %v807 = vunpack.c.h.b16 %v165
    %v808 = vunpack.c.l.b16 %v166
    %v809 = vunpack.c.h.b16 %v166
    %v810 = vunpack.c.l.b16 %v167
    %v811 = vunpack.c.h.b16 %v167
    %v812 = vunpack.c.l.b16 %v168
    %v813 = vunpack.c.h.b16 %v168
    %v814 = vunpack.c.l.b16 %v169
    %v815 = vunpack.c.h.b16 %v169
    %v816 = vunpack.c.l.b16 %v170
    %v817 = vunpack.c.h.b16 %v170
    %v818 = vunpack.c.l.b16 %v171
    %v819 = vunpack.c.h.b16 %v171
    %v820 = vunpack.c.l.b16 %v172
    %v821 = vunpack.c.h.b16 %v172
    %v822 = vunpack.c.l.b16 %v173
    %v823 = vunpack.c.h.b16 %v173
    %v824 = vunpack.c.l.b16 %v174
    %v825 = vunpack.c.h.b16 %v174
    %v826 = vunpack.c.l.b16 %v175
    %v827 = vunpack.c.h.b16 %v175
    %v828 = vunpack.c.l.b16 %v176
    %v829 = vunpack.c.h.b16 %v176
    %v830 = vunpack.c.l.b16 %v177
    %v831 = vunpack.c.h.b16 %v177
    %v832 = vunpack.c.l.b16 %v178
    %v833 = vunpack.c.h.b16 %v178
    %v834 = vunpack.c.l.b16 %v179
    %v835 = vunpack.c.h.b16 %v179
    %v836 = vunpack.c.l.b16 %v180
    %v837 = vunpack.c.h.b16 %v180
    %v838 = vunpack.c.l.b16 %v181
    %v839 = vunpack.c.h.b16 %v181
    %v840 = vunpack.c.l.b16 %v182
    %v841 = vunpack.c.h.b16 %v182
    %v842 = vunpack.c.l.b16 %v183
    %v843 = vunpack.c.h.b16 %v183
    %v844 = vunpack.c.l.b16 %v184
    %v845 = vunpack.c.h.b16 %v184
    %v846 = vunpack.c.l.b16 %v185
    %v847 = vunpack.c.h.b16 %v185
    %v848 = vunpack.c.l.b16 %v186
    %v849 = vunpack.c.h.b16 %v186
    %v850 = vunpack.c.l.b16 %v187
    %v851 = vunpack.c.h.b16 %v187
    %v852 = vunpack.c.l.b16 %v188
    %v853 = vunpack.c.h.b16 %v188
    %v854 = vunpack.c.l.b16 %v189
    %v855 = vunpack.c.h.b16 %v189
    %v856 = vunpack.c.l.b16 %v190
    %v857 = vunpack.c.h.b16 %v190
    %v858 = vunpack.c.l.b16 %v191
    %v859 = vunpack.c.h.b16 %v191
    %v860 = vunpack.c.l.b16 %v192
    %v861 = vunpack.c.h.b16 %v192
    %v862 = vunpack.c.l.b16 %v193
    %v863 = vunpack.c.h.b16 %v193
    %v864 = vunpack.c.l.b16 %v194
    %v865 = vunpack.c.h.b16 %v194
    %v866 = vunpack.c.l.b16 %v195
    %v867 = vunpack.c.h.b16 %v195
    %v868 = vunpack.c.l.b16 %v196
    %v869 = vunpack.c.h.b16 %v196
    %v870 = vunpack.c.l.b16 %v197
    %v871 = vunpack.c.h.b16 %v197
    %v872 = vunpack.c.l.b16 %v198
    %v873 = vunpack.c.h.b16 %v198
    %v874 = vunpack.c.l.b16 %v199
    %v875 = vunpack.c.h.b16 %v199
    %v876 = vunpack.c.l.b16 %v200
    %v877 = vunpack.c.h.b16 %v200
    %v878 = vunpack.c.l.b16 %v201
    %v879 = vunpack.c.h.b16 %v201
    %v880 = vunpack.c.l.b16 %v202
    %v881 = vunpack.c.h.b16 %v202
    %v882 = vunpack.c.l.b16 %v203
    %v883 = vunpack.c.h.b16 %v203
    %v884 = vunpack.c.l.b16 %v204
    %v885 = vunpack.c.h.b16 %v204
    %v886 = vunpack.c.l.b16 %v205
    %v887 = vunpack.c.h.b16 %v205
    %v888 = vunpack.c.l.b16 %v206
    %v889 = vunpack.c.h.b16 %v206
    %v890 = vunpack.c.l.b16 %v207
    %v891 = vunpack.c.h.b16 %v207
    %v892 = vunpack.c.l.b16 %v208
    %v893 = vunpack.c.h.b16 %v208
    %v894 = vunpack.c.l.b16 %v209
    %v895 = vunpack.c.h.b16 %v209
    %v896 = vunpack.c.l.b16 %v210
    %v897 = vunpack.c.h.b16 %v210
    %v898 = vunpack.c.l.b16 %v211
    %v899 = vunpack.c.h.b16 %v211
    %v900 = vunpack.c.l.b16 %v212
    %v901 = vunpack.c.h.b16 %v212
    %v902 = vunpack.c.l.b16 %v213
    %v903 = vunpack.c.h.b16 %v213
    %v904 = vunpack.c.l.b16 %v214
    %v905 = vunpack.c.h.b16 %v214
    %v906 = vunpack.c.l.b16 %v215
    %v907 = vunpack.c.h.b16 %v215
    %v908 = vunpack.c.l.b16 %v216
    %v909 = vunpack.c.h.b16 %v216
    %v910 = vunpack.c.l.b16 %v217
    %v911 = vunpack.c.h.b16 %v217
    %v912 = vunpack.c.l.b16 %v218
    %v913 = vunpack.c.h.b16 %v218
    %v914 = vunpack.c.l.b16 %v219
    %v915 = vunpack.c.h.b16 %v219
    %v916 = vunpack.c.l.b16 %v220
    %v917 = vunpack.c.h.b16 %v220
    %v918 = vunpack.c.l.b16 %v221
    %v919 = vunpack.c.h.b16 %v221
    %v920 = vunpack.c.l.b16 %v222
    %v921 = vunpack.c.h.b16 %v222
    %v922 = vunpack.c.l.b16 %v223
    %v923 = vunpack.c.h.b16 %v223
    %v924 = vunpack.c.l.b16 %v224
    %v925 = vunpack.c.h.b16 %v224
    %v926 = vunpack.c.l.b16 %v225
    %v927 = vunpack.c.h.b16 %v225
    %v928 = vunpack.c.l.b16 %v226
    %v929 = vunpack.c.h.b16 %v226
    %v930 = vunpack.c.l.b16 %v227
    %v931 = vunpack.c.h.b16 %v227
    %v932 = vunpack.c.l.b16 %v228
    %v933 = vunpack.c.h.b16 %v228
    %v934 = vunpack.c.l.b16 %v229
    %v935 = vunpack.c.h.b16 %v229
    %v936 = vunpack.c.l.b16 %v230
    %v937 = vunpack.c.h.b16 %v230
    %v938 = vunpack.c.l.b16 %v231
    %v939 = vunpack.c.h.b16 %v231
    %v940 = vunpack.c.l.b16 %v232
    %v941 = vunpack.c.h.b16 %v232
    %v942 = vunpack.c.l.b16 %v233
    %v943 = vunpack.c.h.b16 %v233
    %v944 = vunpack.c.l.b16 %v234
    %v945 = vunpack.c.h.b16 %v234
    %v946 = vunpack.c.l.b16 %v235
    %v947 = vunpack.c.h.b16 %v235
    %v948 = vunpack.c.l.b16 %v236
    %v949 = vunpack.c.h.b16 %v236
    %v950 = vunpack.c.l.b16 %v237
    %v951 = vunpack.c.h.b16 %v237
    %v952 = vunpack.c.l.b16 %v238
    %v953 = vunpack.c.h.b16 %v238
    %v954 = vunpack.c.l.b16 %v239
    %v955 = vunpack.c.h.b16 %v239
    %v956 = vunpack.c.l.b16 %v240
    %v957 = vunpack.c.h.b16 %v240
    %v958 = vunpack.c.l.b16 %v241
    %v959 = vunpack.c.h.b16 %v241
    %v960 = vunpack.c.l.b16 %v242
    %v961 = vunpack.c.h.b16 %v242
    %v962 = vunpack.c.l.b16 %v243
    %v963 = vunpack.c.h.b16 %v243
    %v964 = vunpack.c.l.b16 %v244
    %v965 = vunpack.c.h.b16 %v244
    %v966 = vunpack.c.l.b16 %v245
    %v967 = vunpack.c.h.b16 %v245
    %v968 = vunpack.c.l.b16 %v246
    %v969 = vunpack.c.h.b16 %v246
    %v970 = vunpack.c.l.b16 %v247
    %v971 = vunpack.c.h.b16 %v247
    %v972 = vunpack.c.l.b16 %v248
    %v973 = vunpack.c.h.b16 %v248
    %v974 = vunpack.c.l.b16 %v249
    %v975 = vunpack.c.h.b16 %v249
    %v976 = vunpack.c.l.b16 %v250
    %v977 = vunpack.c.h.b16 %v250
    %v978 = vunpack.c.l.b16 %v251
    %v979 = vunpack.c.h.b16 %v251
    %v980 = vunpack.c.l.b16 %v252
    %v981 = vunpack.c.h.b16 %v252
    %v982 = vunpack.c.l.b16 %v253
    %v983 = vunpack.c.h.b16 %v253
    %v984 = vunpack.c.l.b16 %v254
    %v985 = vunpack.c.h.b16 %v254
    %v986 = vunpack.c.l.b16 %v255
    %v987 = vunpack.c.h.b16 %v255
    %v988 = vunpack.c.l.b16 %v256
    %v989 = vunpack.c.h.b16 %v256
    %v990 = vunpack.c.l.b16 %v257
    %v991 = vunpack.c.h.b16 %v257
    %v992 = vunpack.c.l.b16 %v258
    %v993 = vunpack.c.h.b16 %v258
    %v994 = vunpack.c.l.b16 %v259
    %v995 = vunpack.c.h.b16 %v259
    %v996 = vunpack.c.l.b16 %v260
    %v997 = vunpack.c.h.b16 %v260
    %v998 = vunpack.c.l.b16 %v261
    %v999 = vunpack.c.h.b16 %v261
    %v1000 = vunpack.c.l.b16 %v262
    %v1001 = vunpack.c.h.b16 %v262
    %v1002 = vunpack.c.l.b16 %v263
    %v1003 = vunpack.c.h.b16 %v263
    %v1004 = vunpack.c.l.b16 %v264
    %v1005 = vunpack.c.h.b16 %v264
    %v1006 = vunpack.c.l.b16 %v265
    %v1007 = vunpack.c.h.b16 %v265
    %v1008 = vunpack.c.l.b16 %v266
    %v1009 = vunpack.c.h.b16 %v266
    %v1010 = vunpack.c.l.b16 %v267
    %v1011 = vunpack.c.h.b16 %v267
    %v1012 = vunpack.c.l.b16 %v268
    %v1013 = vunpack.c.h.b16 %v268
    %v1014 = vunpack.c.l.b16 %v269
    %v1015 = vunpack.c.h.b16 %v269
    %v1016 = vunpack.c.l.b16 %v270
    %v1017 = vunpack.c.h.b16 %v270
    %v1018 = vunpack.c.l.b16 %v271
    %v1019 = vunpack.c.h.b16 %v271
    %v1020 = vunpack.c.l.b16 %v272
    %v1021 = vunpack.c.h.b16 %v272
    %v1022 = vunpack.c.l.b16 %v273
    %v1023 = vunpack.c.h.b16 %v273
    %v1024 = vunpack.c.l.b16 %v274
    %v1025 = vunpack.c.h.b16 %v274
    %v1026 = vunpack.c.l.b16 %v275
    %v1027 = vunpack.c.h.b16 %v275
    %v1028 = vunpack.c.l.b16 %v276
    %v1029 = vunpack.c.h.b16 %v276
    %v1030 = vunpack.c.l.b16 %v277
    %v1031 = vunpack.c.h.b16 %v277
    %v1032 = vunpack.c.l.b16 %v278
    %v1033 = vunpack.c.h.b16 %v278
    %v1034 = vunpack.c.l.b16 %v279
    %v1035 = vunpack.c.h.b16 %v279
    %v1036 = vunpack.c.l.b16 %v280
    %v1037 = vunpack.c.h.b16 %v280
    %v1038 = vunpack.c.l.b16 %v281
    %v1039 = vunpack.c.h.b16 %v281
    %v1040 = vunpack.c.l.b16 %v282
    %v1041 = vunpack.c.h.b16 %v282
    %v1042 = vunpack.c.l.b16 %v283
    %v1043 = vunpack.c.h.b16 %v283
    %v1044 = vunpack.c.l.b16 %v284
    %v1045 = vunpack.c.h.b16 %v284
    %v1046 = vunpack.c.l.b16 %v285
    %v1047 = vunpack.c.h.b16 %v285
    %v1048 = vunpack.c.l.b16 %v286
    %v1049 = vunpack.c.h.b16 %v286
    %v1050 = vunpack.c.l.b16 %v287
    %v1051 = vunpack.c.h.b16 %v287
    %v1052 = vunpack.c.l.b16 %v288
    %v1053 = vunpack.c.h.b16 %v288
    %v1054 = vunpack.c.l.b16 %v289
    %v1055 = vunpack.c.h.b16 %v289
    %v1056 = vunpack.c.l.b16 %v290
    %v1057 = vunpack.c.h.b16 %v290
    %v1058 = vunpack.c.l.b16 %v291
    %v1059 = vunpack.c.h.b16 %v291
    %v1060 = vunpack.c.l.b16 %v292
    %v1061 = vunpack.c.h.b16 %v292
    %v1062 = vunpack.c.l.b16 %v293
    %v1063 = vunpack.c.h.b16 %v293
    %v1064 = vunpack.c.l.b16 %v294
    %v1065 = vunpack.c.h.b16 %v294
    %v1066 = vunpack.c.l.b16 %v295
    %v1067 = vunpack.c.h.b16 %v295
    %v1068 = vunpack.c.l.b16 %v296
    %v1069 = vunpack.c.h.b16 %v296
    %v1070 = vunpack.c.l.b16 %v297
    %v1071 = vunpack.c.h.b16 %v297
    %v1072 = vunpack.c.l.b16 %v298
    %v1073 = vunpack.c.h.b16 %v298
    %v1074 = vunpack.c.l.b16 %v299
    %v1075 = vunpack.c.h.b16 %v299
    %v1076 = vunpack.c.l.b16 %v300
    %v1077 = vunpack.c.h.b16 %v300
    %v1078 = vunpack.c.l.b16 %v301
    %v1079 = vunpack.c.h.b16 %v301
    %v1080 = vunpack.c.l.b16 %v302
    %v1081 = vunpack.c.h.b16 %v302
    %v1082 = vunpack.c.l.b16 %v303
    %v1083 = vunpack.c.h.b16 %v303
    %v1084 = vunpack.c.l.b16 %v304
    %v1085 = vunpack.c.h.b16 %v304
    %v1086 = vunpack.c.l.b16 %v305
    %v1087 = vunpack.c.h.b16 %v305
    %v1088 = vunpack.c.l.b16 %v306
    %v1089 = vunpack.c.h.b16 %v306
    %v1090 = vunpack.c.l.b16 %v307
    %v1091 = vunpack.c.h.b16 %v307
    %v1092 = vunpack.c.l.b16 %v308
    %v1093 = vunpack.c.h.b16 %v308
    %v1094 = vunpack.c.l.b16 %v309
    %v1095 = vunpack.c.h.b16 %v309
    %v1096 = vunpack.c.l.b16 %v310
    %v1097 = vunpack.c.h.b16 %v310
    %v1098 = vunpack.c.l.b16 %v311
    %v1099 = vunpack.c.h.b16 %v311
    %v1100 = vunpack.c.l.b16 %v312
    %v1101 = vunpack.c.h.b16 %v312
    %v1102 = vunpack.c.l.b16 %v313
    %v1103 = vunpack.c.h.b16 %v313
    %v1104 = vunpack.c.l.b16 %v314
    %v1105 = vunpack.c.h.b16 %v314
    %v1106 = vunpack.c.l.b16 %v315
    %v1107 = vunpack.c.h.b16 %v315
    %v1108 = vunpack.c.l.b16 %v316
    %v1109 = vunpack.c.h.b16 %v316
    %v1110 = vunpack.c.l.b16 %v317
    %v1111 = vunpack.c.h.b16 %v317
    %v1112 = vunpack.c.l.b16 %v318
    %v1113 = vunpack.c.h.b16 %v318
    %v1114 = vunpack.c.l.b16 %v319
    %v1115 = vunpack.c.h.b16 %v319
    %v1116 = vunpack.c.l.b16 %v320
    %v1117 = vunpack.c.h.b16 %v320
    %v1118 = vunpack.c.l.b16 %v321
    %v1119 = vunpack.c.h.b16 %v321
    %v1120 = vunpack.c.l.b16 %v322
    %v1121 = vunpack.c.h.b16 %v322
    %v1122 = vunpack.c.l.b16 %v323
    %v1123 = vunpack.c.h.b16 %v323
    %v1124 = vunpack.c.l.b16 %v324
    %v1125 = vunpack.c.h.b16 %v324
    %v1126 = vunpack.c.l.b16 %v325
    %v1127 = vunpack.c.h.b16 %v325
    %v1128 = vunpack.c.l.b16 %v326
    %v1129 = vunpack.c.h.b16 %v326
    %v1130 = vunpack.c.l.b16 %v327
    %v1131 = vunpack.c.h.b16 %v327
    %v1132 = vunpack.c.l.b16 %v328
    %v1133 = vunpack.c.h.b16 %v328
    %v1134 = vunpack.c.l.b16 %v329
    %v1135 = vunpack.c.h.b16 %v329
    %v1136 = vunpack.c.l.b16 %v330
    %v1137 = vunpack.c.h.b16 %v330
    %v1138 = vunpack.c.l.b16 %v331
    %v1139 = vunpack.c.h.b16 %v331
    %v1140 = vunpack.c.l.b16 %v332
    %v1141 = vunpack.c.h.b16 %v332
    %v1142 = vunpack.c.l.b16 %v333
    %v1143 = vunpack.c.h.b16 %v333
    %v1144 = vunpack.c.l.b16 %v334
    %v1145 = vunpack.c.h.b16 %v334
    %v1146 = vunpack.c.l.b16 %v335
    %v1147 = vunpack.c.h.b16 %v335
    %v1148 = vunpack.c.l.b16 %v336
    %v1149 = vunpack.c.h.b16 %v336
    %v1150 = vunpack.c.l.b16 %v337
    %v1151 = vunpack.c.h.b16 %v337
    %v1152 = vunpack.c.l.b16 %v338
    %v1153 = vunpack.c.h.b16 %v338
    %v1154 = vunpack.c.l.b16 %v339
    %v1155 = vunpack.c.h.b16 %v339
    %v1156 = vunpack.c.l.b16 %v340
    %v1157 = vunpack.c.h.b16 %v340
    %v1158 = vunpack.c.l.b16 %v341
    %v1159 = vunpack.c.h.b16 %v341
    %v1160 = vunpack.c.l.b16 %v342
    %v1161 = vunpack.c.h.b16 %v342
    %v1162 = vunpack.c.l.b16 %v343
    %v1163 = vunpack.c.h.b16 %v343
    %v1164 = vpack.c.b16 %v668, %v652
    %v1165 = vpack.c.b16 %v669, %v653
    %v1166 = vpack.c.b16 %v670, %v654
    %v1167 = vpack.c.b16 %v671, %v655
    %v1168 = vpack.c.b16 %v672, %v656
    %v1169 = vpack.c.b16 %v673, %v657
    %v1170 = vpack.c.b16 %v674, %v658
    %v1171 = vpack.c.b16 %v675, %v659
    %v1172 = vpack.c.b16 %v676, %v660
    %v1173 = vpack.c.b16 %v677, %v661
    %v1174 = vpack.c.b16 %v678, %v662
    %v1175 = vpack.c.b16 %v679, %v663
    %v1176 = vpack.c.b16 %v680, %v664
    %v1177 = vpack.c.b16 %v681, %v665
    %v1178 = vpack.c.b16 %v682, %v666
    %v1179 = vpack.c.b16 %v683, %v667
    %v1180 = vpack.c.b16 %v700, %v684
    %v1181 = vpack.c.b16 %v701, %v685
    %v1182 = vpack.c.b16 %v702, %v686
    %v1183 = vpack.c.b16 %v703, %v687
    %v1184 = vpack.c.b16 %v704, %v688
    %v1185 = vpack.c.b16 %v705, %v689
    %v1186 = vpack.c.b16 %v706, %v690
    %v1187 = vpack.c.b16 %v707, %v691
    %v1188 = vpack.c.b16 %v708, %v692
    %v1189 = vpack.c.b16 %v709, %v693
    %v1190 = vpack.c.b16 %v710, %v694
    %v1191 = vpack.c.b16 %v711, %v695
    %v1192 = vpack.c.b16 %v712, %v696
    %v1193 = vpack.c.b16 %v713, %v697
    %v1194 = vpack.c.b16 %v714, %v698
    %v1195 = vpack.c.b16 %v715, %v699
    %v1196 = vpack.c.b16 %v732, %v716
    %v1197 = vpack.c.b16 %v733, %v717
    %v1198 = vpack.c.b16 %v734, %v718
    %v1199 = vpack.c.b16 %v735, %v719
    %v1200 = vpack.c.b16 %v736, %v720
    %v1201 = vpack.c.b16 %v737, %v721
    %v1202 = vpack.c.b16 %v738, %v722
    %v1203 = vpack.c.b16 %v739, %v723
    %v1204 = vpack.c.b16 %v740, %v724
    %v1205 = vpack.c.b16 %v741, %v725
    %v1206 = vpack.c.b16 %v742, %v726
    %v1207 = vpack.c.b16 %v743, %v727
    %v1208 = vpack.c.b16 %v744, %v728
    %v1209 = vpack.c.b16 %v745, %v729
    %v1210 = vpack.c.b16 %v746, %v730
    %v1211 = vpack.c.b16 %v747, %v731
    %v1212 = vpack.c.b16 %v764, %v748
    %v1213 = vpack.c.b16 %v765, %v749
    %v1214 = vpack.c.b16 %v766, %v750
    %v1215 = vpack.c.b16 %v767, %v751
    %v1216 = vpack.c.b16 %v768, %v752
    %v1217 = vpack.c.b16 %v769, %v753
    %v1218 = vpack.c.b16 %v770, %v754
    %v1219 = vpack.c.b16 %v771, %v755
    %v1220 = vpack.c.b16 %v772, %v756
    %v1221 = vpack.c.b16 %v773, %v757
    %v1222 = vpack.c.b16 %v774, %v758
    %v1223 = vpack.c.b16 %v775, %v759
    %v1224 = vpack.c.b16 %v776, %v760
    %v1225 = vpack.c.b16 %v777, %v761
    %v1226 = vpack.c.b16 %v778, %v762
    %v1227 = vpack.c.b16 %v779, %v763
    %v1228 = vpack.c.b16 %v796, %v780
    %v1229 = vpack.c.b16 %v797, %v781
    %v1230 = vpack.c.b16 %v798, %v782
    %v1231 = vpack.c.b16 %v799, %v783
    %v1232 = vpack.c.b16 %v800, %v784
    %v1233 = vpack.c.b16 %v801, %v785
    %v1234 = vpack.c.b16 %v802, %v786
    %v1235 = vpack.c.b16 %v803, %v787
    %v1236 = vpack.c.b16 %v804, %v788
    %v1237 = vpack.c.b16 %v805, %v789
    %v1238 = vpack.c.b16 %v806, %v790
    %v1239 = vpack.c.b16 %v807, %v791
    %v1240 = vpack.c.b16 %v808, %v792
    %v1241 = vpack.c.b16 %v809, %v793
    %v1242 = vpack.c.b16 %v810, %v794
    %v1243 = vpack.c.b16 %v811, %v795
    %v1244 = vpack.c.b16 %v828, %v812
    %v1245 = vpack.c.b16 %v829, %v813
    %v1246 = vpack.c.b16 %v830, %v814
    %v1247 = vpack.c.b16 %v831, %v815
    %v1248 = vpack.c.b16 %v832, %v816
    %v1249 = vpack.c.b16 %v833, %v817
    %v1250 = vpack.c.b16 %v834, %v818
    %v1251 = vpack.c.b16 %v835, %v819
    %v1252 = vpack.c.b16 %v836, %v820
    %v1253 = vpack.c.b16 %v837, %v821
    %v1254 = vpack.c.b16 %v838, %v822
    %v1255 = vpack.c.b16 %v839, %v823
    %v1256 = vpack.c.b16 %v840, %v824
    %v1257 = vpack.c.b16 %v841, %v825
    %v1258 = vpack.c.b16 %v842, %v826
    %v1259 = vpack.c.b16 %v843, %v827
    %v1260 = vpack.c.b16 %v860, %v844
    %v1261 = vpack.c.b16 %v861, %v845
    %v1262 = vpack.c.b16 %v862, %v846
    %v1263 = vpack.c.b16 %v863, %v847
    %v1264 = vpack.c.b16 %v864, %v848
    %v1265 = vpack.c.b16 %v865, %v849
    %v1266 = vpack.c.b16 %v866, %v850
    %v1267 = vpack.c.b16 %v867, %v851
    %v1268 = vpack.c.b16 %v868, %v852
    %v1269 = vpack.c.b16 %v869, %v853
    %v1270 = vpack.c.b16 %v870, %v854
    %v1271 = vpack.c.b16 %v871, %v855
    %v1272 = vpack.c.b16 %v872, %v856
    %v1273 = vpack.c.b16 %v873, %v857
    %v1274 = vpack.c.b16 %v874, %v858
    %v1275 = vpack.c.b16 %v875, %v859
    %v1276 = vpack.c.b16 %v892, %v876
    %v1277 = vpack.c.b16 %v893, %v877
    %v1278 = vpack.c.b16 %v894, %v878
    %v1279 = vpack.c.b16 %v895, %v879
    %v1280 = vpack.c.b16 %v896, %v880
    %v1281 = vpack.c.b16 %v897, %v881
    %v1282 = vpack.c.b16 %v898, %v882
    %v1283 = vpack.c.b16 %v899, %v883
    %v1284 = vpack.c.b16 %v900, %v884
    %v1285 = vpack.c.b16 %v901, %v885
    %v1286 = vpack.c.b16 %v902, %v886
    %v1287 = vpack.c.b16 %v903, %v887
    %v1288 = vpack.c.b16 %v904, %v888
    %v1289 = vpack.c.b16 %v905, %v889
    %v1290 = vpack.c.b16 %v906, %v890
    %v1291 = vpack.c.b16 %v907, %v891
    %v1292 = vpack.c.b16 %v924, %v908
    %v1293 = vpack.c.b16 %v925, %v909
    %v1294 = vpack.c.b16 %v926, %v910
    %v1295 = vpack.c.b16 %v927, %v911
    %v1296 = vpack.c.b16 %v928, %v912
    %v1297 = vpack.c.b16 %v929, %v913
    %v1298 = vpack.c.b16 %v930, %v914
    %v1299 = vpack.c.b16 %v931, %v915
    %v1300 = vpack.c.b16 %v932, %v916
    %v1301 = vpack.c.b16 %v933, %v917
    %v1302 = vpack.c.b16 %v934, %v918
    %v1303 = vpack.c.b16 %v935, %v919
    %v1304 = vpack.c.b16 %v936, %v920
    %v1305 = vpack.c.b16 %v937, %v921
    %v1306 = vpack.c.b16 %v938, %v922
    %v1307 = vpack.c.b16 %v939, %v923
    %v1308 = vpack.c.b16 %v956, %v940
    %v1309 = vpack.c.b16 %v957, %v941
    %v1310 = vpack.c.b16 %v958, %v942
    %v1311 = vpack.c.b16 %v959, %v943
    %v1312 = vpack.c.b16 %v960, %v944
    %v1313 = vpack.c.b16 %v961, %v945
    %v1314 = vpack.c.b16 %v962, %v946
    %v1315 = vpack.c.b16 %v963, %v947
    %v1316 = vpack.c.b16 %v964, %v948
    %v1317 = vpack.c.b16 %v965, %v949
    %v1318 = vpack.c.b16 %v966, %v950
    %v1319 = vpack.c.b16 %v967, %v951
    %v1320 = vpack.c.b16 %v968, %v952
    %v1321 = vpack.c.b16 %v969, %v953
    %v1322 = vpack.c.b16 %v970, %v954
    %v1323 = vpack.c.b16 %v971, %v955
    %v1324 = vpack.c.b16 %v988, %v972
    %v1325 = vpack.c.b16 %v989, %v973
    %v1326 = vpack.c.b16 %v990, %v974
    %v1327 = vpack.c.b16 %v991, %v975
    %v1328 = vpack.c.b16 %v992, %v976
    %v1329 = vpack.c.b16 %v993, %v977
    %v1330 = vpack.c.b16 %v994, %v978
    %v1331 = vpack.c.b16 %v995, %v979
    %v1332 = vpack.c.b16 %v996, %v980
    %v1333 = vpack.c.b16 %v997, %v981
    %v1334 = vpack.c.b16 %v998, %v982
    %v1335 = vpack.c.b16 %v999, %v983
    %v1336 = vpack.c.b16 %v1000, %v984
    %v1337 = vpack.c.b16 %v1001, %v985
    %v1338 = vpack.c.b16 %v1002, %v986
    %v1339 = vpack.c.b16 %v1003, %v987
    %v1340 = vpack.c.b16 %v1020, %v1004
    %v1341 = vpack.c.b16 %v1021, %v1005
    %v1342 = vpack.c.b16 %v1022, %v1006
    %v1343 = vpack.c.b16 %v1023, %v1007
    %v1344 = vpack.c.b16 %v1024, %v1008
    %v1345 = vpack.c.b16 %v1025, %v1009
    %v1346 = vpack.c.b16 %v1026, %v1010
    %v1347 = vpack.c.b16 %v1027, %v1011
    %v1348 = vpack.c.b16 %v1028, %v1012
    %v1349 = vpack.c.b16 %v1029, %v1013
    %v1350 = vpack.c.b16 %v1030, %v1014
    %v1351 = vpack.c.b16 %v1031, %v1015
    %v1352 = vpack.c.b16 %v1032, %v1016
    %v1353 = vpack.c.b16 %v1033, %v1017
    %v1354 = vpack.c.b16 %v1034, %v1018
    %v1355 = vpack.c.b16 %v1035, %v1019
    %v1356 = vpack.c.b16 %v1052, %v1036
    %v1357 = vpack.c.b16 %v1053, %v1037
    %v1358 = vpack.c.b16 %v1054, %v1038
    %v1359 = vpack.c.b16 %v1055, %v1039
    %v1360 = vpack.c.b16 %v1056, %v1040
    %v1361 = vpack.c.b16 %v1057, %v1041
    %v1362 = vpack.c.b16 %v1058, %v1042
    %v1363 = vpack.c.b16 %v1059, %v1043
    %v1364 = vpack.c.b16 %v1060, %v1044
    %v1365 = vpack.c.b16 %v1061, %v1045
    %v1366 = vpack.c.b16 %v1062, %v1046
    %v1367 = vpack.c.b16 %v1063, %v1047
    %v1368 = vpack.c.b16 %v1064, %v1048
    %v1369 = vpack.c.b16 %v1065, %v1049
    %v1370 = vpack.c.b16 %v1066, %v1050
    %v1371 = vpack.c.b16 %v1067, %v1051
    %v1372 = vpack.c.b16 %v1084, %v1068
    %v1373 = vpack.c.b16 %v1085, %v1069
    %v1374 = vpack.c.b16 %v1086, %v1070
    %v1375 = vpack.c.b16 %v1087, %v1071
    %v1376 = vpack.c.b16 %v1088, %v1072
    %v1377 = vpack.c.b16 %v1089, %v1073
    %v1378 = vpack.c.b16 %v1090, %v1074
    %v1379 = vpack.c.b16 %v1091, %v1075
    %v1380 = vpack.c.b16 %v1092, %v1076
    %v1381 = vpack.c.b16 %v1093, %v1077
    %v1382 = vpack.c.b16 %v1094, %v1078
    %v1383 = vpack.c.b16 %v1095, %v1079
    %v1384 = vpack.c.b16 %v1096, %v1080
    %v1385 = vpack.c.b16 %v1097, %v1081
    %v1386 = vpack.c.b16 %v1098, %v1082
    %v1387 = vpack.c.b16 %v1099, %v1083
    %v1388 = vpack.c.b16 %v1116, %v1100
    %v1389 = vpack.c.b16 %v1117, %v1101
    %v1390 = vpack.c.b16 %v1118, %v1102
    %v1391 = vpack.c.b16 %v1119, %v1103
    %v1392 = vpack.c.b16 %v1120, %v1104
    %v1393 = vpack.c.b16 %v1121, %v1105
    %v1394 = vpack.c.b16 %v1122, %v1106
    %v1395 = vpack.c.b16 %v1123, %v1107
    %v1396 = vpack.c.b16 %v1124, %v1108
    %v1397 = vpack.c.b16 %v1125, %v1109
    %v1398 = vpack.c.b16 %v1126, %v1110
    %v1399 = vpack.c.b16 %v1127, %v1111
    %v1400 = vpack.c.b16 %v1128, %v1112
    %v1401 = vpack.c.b16 %v1129, %v1113
    %v1402 = vpack.c.b16 %v1130, %v1114
    %v1403 = vpack.c.b16 %v1131, %v1115
    %v1404 = vpack.c.b16 %v1148, %v1132
    %v1405 = vpack.c.b16 %v1149, %v1133
    %v1406 = vpack.c.b16 %v1150, %v1134
    %v1407 = vpack.c.b16 %v1151, %v1135
    %v1408 = vpack.c.b16 %v1152, %v1136
    %v1409 = vpack.c.b16 %v1153, %v1137
    %v1410 = vpack.c.b16 %v1154, %v1138
    %v1411 = vpack.c.b16 %v1155, %v1139
    %v1412 = vpack.c.b16 %v1156, %v1140
    %v1413 = vpack.c.b16 %v1157, %v1141
    %v1414 = vpack.c.b16 %v1158, %v1142
    %v1415 = vpack.c.b16 %v1159, %v1143
    %v1416 = vpack.c.b16 %v1160, %v1144
    %v1417 = vpack.c.b16 %v1161, %v1145
    %v1418 = vpack.c.b16 %v1162, %v1146
    %v1419 = vpack.c.b16 %v1163, %v1147
    %1676 = vmatprep.subr.bf16.mxu0 %v1277
    %1677 = vmatpush1.bf16.xpose.msra.mxu0 %v1276
    %1678 = vmatprep.subr.bf16.mxu0 %v1261
    %1679 = vmatpush1.bf16.xpose.msra.mxu0 %v1260
    %1680 = vmatprep.subr.bf16.mxu0 %v1245
    %1681 = vmatpush1.bf16.xpose.msra.mxu0 %v1244
    %1682 = vmatprep.subr.bf16.mxu0 %v1229
    %1683 = vmatpush1.bf16.xpose.msra.mxu0 %v1228
    %1684 = vmatprep.subr.bf16.mxu0 %v1213
    %1685 = vmatpush1.bf16.xpose.msra.mxu0 %v1212
    %1686 = vmatprep.subr.bf16.mxu0 %v1197
    %1687 = vmatpush1.bf16.xpose.msra.mxu0 %v1196
    %1688 = vmatprep.subr.bf16.mxu0 %v1181
    %1689 = vmatpush1.bf16.xpose.msra.mxu0 %v1180
    %1690 = vmatprep.subr.bf16.mxu0 %v1165
    %1691 = vmatpush1.bf16.xpose.msra.mxu0 %v1164
    %1692 = vmatprep.subr.bf16.mxu0 %v1405
    %1693 = vmatpush2.bf16.xpose.msra.mxu0 %v1404
    %1694 = vmatprep.subr.bf16.mxu0 %v1389
    %1695 = vmatpush2.bf16.xpose.msra.mxu0 %v1388
    %1696 = vmatprep.subr.bf16.mxu0 %v1373
    %1697 = vmatpush2.bf16.xpose.msra.mxu0 %v1372
    %1698 = vmatprep.subr.bf16.mxu0 %v1357
    %1699 = vmatpush2.bf16.xpose.msra.mxu0 %v1356
    %1700 = vmatprep.subr.bf16.mxu0 %v1341
    %1701 = vmatpush2.bf16.xpose.msra.mxu0 %v1340
    %1702 = vmatprep.subr.bf16.mxu0 %v1325
    %1703 = vmatpush2.bf16.xpose.msra.mxu0 %v1324
    %1704 = vmatprep.subr.bf16.mxu0 %v1309
    %1705 = vmatpush2.bf16.xpose.msra.mxu0 %v1308
    %1706 = vmatprep.subr.bf16.mxu0 %v1293
    %1707 = vmatpush2.bf16.xpose.msra.mxu0 %v1292
    %1708 = vmatprep.mubr.bf16.mxu0 %v377
    %1709 = vmatmul.mubr.bf16.gmra.mxu0 %v376
    %v1710 = vpop.f32.mrf.mxu0
    %v1711 = vadd.f32 0.0, %v1710
    %v1712 = vpop.f32.mrf.mxu0
    %v1713 = vadd.f32 0.0, %v1712
    %v1714 = vpop.f32.mrf.mxu0
    %v1715 = vadd.f32 0.0, %v1714
    %v1716 = vpop.f32.mrf.mxu0
    %v1717 = vadd.f32 0.0, %v1716
    %1718 = vdwg.mxu0
    %1719 = vmatprep.subr.bf16.mxu0 %v1279
    %1720 = vmatpush1.bf16.xpose.msra.mxu0 %v1278
    %1721 = vmatprep.subr.bf16.mxu0 %v1263
    %1722 = vmatpush1.bf16.xpose.msra.mxu0 %v1262
    %1723 = vmatprep.subr.bf16.mxu0 %v1247
    %1724 = vmatpush1.bf16.xpose.msra.mxu0 %v1246
    %1725 = vmatprep.subr.bf16.mxu0 %v1231
    %1726 = vmatpush1.bf16.xpose.msra.mxu0 %v1230
    %1727 = vmatprep.subr.bf16.mxu0 %v1215
    %1728 = vmatpush1.bf16.xpose.msra.mxu0 %v1214
    %1729 = vmatprep.subr.bf16.mxu0 %v1199
    %1730 = vmatpush1.bf16.xpose.msra.mxu0 %v1198
    %1731 = vmatprep.subr.bf16.mxu0 %v1183
    %1732 = vmatpush1.bf16.xpose.msra.mxu0 %v1182
    %1733 = vmatprep.subr.bf16.mxu0 %v1167
    %1734 = vmatpush1.bf16.xpose.msra.mxu0 %v1166
    %1735 = vmatprep.subr.bf16.mxu0 %v1407
    %1736 = vmatpush2.bf16.xpose.msra.mxu0 %v1406
    %1737 = vmatprep.subr.bf16.mxu0 %v1391
    %1738 = vmatpush2.bf16.xpose.msra.mxu0 %v1390
    %1739 = vmatprep.subr.bf16.mxu0 %v1375
    %1740 = vmatpush2.bf16.xpose.msra.mxu0 %v1374
    %1741 = vmatprep.subr.bf16.mxu0 %v1359
    %1742 = vmatpush2.bf16.xpose.msra.mxu0 %v1358
    %1743 = vmatprep.subr.bf16.mxu0 %v1343
    %1744 = vmatpush2.bf16.xpose.msra.mxu0 %v1342
    %1745 = vmatprep.subr.bf16.mxu0 %v1327
    %1746 = vmatpush2.bf16.xpose.msra.mxu0 %v1326
    %1747 = vmatprep.subr.bf16.mxu0 %v1311
    %1748 = vmatpush2.bf16.xpose.msra.mxu0 %v1310
    %1749 = vmatprep.subr.bf16.mxu0 %v1295
    %1750 = vmatpush2.bf16.xpose.msra.mxu0 %v1294
    %1751 = vmatprep.mubr.bf16.mxu0 %v379
    %1752 = vmatmul.mubr.bf16.gmra.mxu0 %v378
    %v1753 = vpop.f32.mrf.mxu0
    %v1754 = vadd.f32 %v1711, %v1753
    %v1755 = vpop.f32.mrf.mxu0
    %v1756 = vadd.f32 %v1713, %v1755
    %v1757 = vpop.f32.mrf.mxu0
    %v1758 = vadd.f32 %v1715, %v1757
    %v1759 = vpop.f32.mrf.mxu0
    %v1760 = vadd.f32 %v1717, %v1759
    %1761 = vdwg.mxu0
    %1762 = vmatprep.subr.bf16.mxu0 %v1281
    %1763 = vmatpush1.bf16.xpose.msra.mxu0 %v1280
    %1764 = vmatprep.subr.bf16.mxu0 %v1265
    %1765 = vmatpush1.bf16.xpose.msra.mxu0 %v1264
    %1766 = vmatprep.subr.bf16.mxu0 %v1249
    %1767 = vmatpush1.bf16.xpose.msra.mxu0 %v1248
    %1768 = vmatprep.subr.bf16.mxu0 %v1233
    %1769 = vmatpush1.bf16.xpose.msra.mxu0 %v1232
    %1770 = vmatprep.subr.bf16.mxu0 %v1217
    %1771 = vmatpush1.bf16.xpose.msra.mxu0 %v1216
    %1772 = vmatprep.subr.bf16.mxu0 %v1201
    %1773 = vmatpush1.bf16.xpose.msra.mxu0 %v1200
    %1774 = vmatprep.subr.bf16.mxu0 %v1185
    %1775 = vmatpush1.bf16.xpose.msra.mxu0 %v1184
    %1776 = vmatprep.subr.bf16.mxu0 %v1169
    %1777 = vmatpush1.bf16.xpose.msra.mxu0 %v1168
    %1778 = vmatprep.subr.bf16.mxu0 %v1409
    %1779 = vmatpush2.bf16.xpose.msra.mxu0 %v1408
    %1780 = vmatprep.subr.bf16.mxu0 %v1393
    %1781 = vmatpush2.bf16.xpose.msra.mxu0 %v1392
    %1782 = vmatprep.subr.bf16.mxu0 %v1377
    %1783 = vmatpush2.bf16.xpose.msra.mxu0 %v1376
    %1784 = vmatprep.subr.bf16.mxu0 %v1361
    %1785 = vmatpush2.bf16.xpose.msra.mxu0 %v1360
    %1786 = vmatprep.subr.bf16.mxu0 %v1345
    %1787 = vmatpush2.bf16.xpose.msra.mxu0 %v1344
    %1788 = vmatprep.subr.bf16.mxu0 %v1329
    %1789 = vmatpush2.bf16.xpose.msra.mxu0 %v1328
    %1790 = vmatprep.subr.bf16.mxu0 %v1313
    %1791 = vmatpush2.bf16.xpose.msra.mxu0 %v1312
    %1792 = vmatprep.subr.bf16.mxu0 %v1297
    %1793 = vmatpush2.bf16.xpose.msra.mxu0 %v1296
    %1794 = vmatprep.mubr.bf16.mxu0 %v381
    %1795 = vmatmul.mubr.bf16.gmra.mxu0 %v380
    %v1796 = vpop.f32.mrf.mxu0
    %v1797 = vadd.f32 %v1754, %v1796
    %v1798 = vpop.f32.mrf.mxu0
    %v1799 = vadd.f32 %v1756, %v1798
    %v1800 = vpop.f32.mrf.mxu0
    %v1801 = vadd.f32 %v1758, %v1800
    %v1802 = vpop.f32.mrf.mxu0
    %v1803 = vadd.f32 %v1760, %v1802
    %1804 = vdwg.mxu0
    %1805 = vmatprep.subr.bf16.mxu0 %v1283
    %1806 = vmatpush1.bf16.xpose.msra.mxu0 %v1282
    %1807 = vmatprep.subr.bf16.mxu0 %v1267
    %1808 = vmatpush1.bf16.xpose.msra.mxu0 %v1266
    %1809 = vmatprep.subr.bf16.mxu0 %v1251
    %1810 = vmatpush1.bf16.xpose.msra.mxu0 %v1250
    %1811 = vmatprep.subr.bf16.mxu0 %v1235
    %1812 = vmatpush1.bf16.xpose.msra.mxu0 %v1234
    %1813 = vmatprep.subr.bf16.mxu0 %v1219
    %1814 = vmatpush1.bf16.xpose.msra.mxu0 %v1218
    %1815 = vmatprep.subr.bf16.mxu0 %v1203
    %1816 = vmatpush1.bf16.xpose.msra.mxu0 %v1202
    %1817 = vmatprep.subr.bf16.mxu0 %v1187
    %1818 = vmatpush1.bf16.xpose.msra.mxu0 %v1186
    %1819 = vmatprep.subr.bf16.mxu0 %v1171
    %1820 = vmatpush1.bf16.xpose.msra.mxu0 %v1170
    %1821 = vmatprep.subr.bf16.mxu0 %v1411
    %1822 = vmatpush2.bf16.xpose.msra.mxu0 %v1410
    %1823 = vmatprep.subr.bf16.mxu0 %v1395
    %1824 = vmatpush2.bf16.xpose.msra.mxu0 %v1394
    %1825 = vmatprep.subr.bf16.mxu0 %v1379
    %1826 = vmatpush2.bf16.xpose.msra.mxu0 %v1378
    %1827 = vmatprep.subr.bf16.mxu0 %v1363
    %1828 = vmatpush2.bf16.xpose.msra.mxu0 %v1362
    %1829 = vmatprep.subr.bf16.mxu0 %v1347
    %1830 = vmatpush2.bf16.xpose.msra.mxu0 %v1346
    %1831 = vmatprep.subr.bf16.mxu0 %v1331
    %1832 = vmatpush2.bf16.xpose.msra.mxu0 %v1330
    %1833 = vmatprep.subr.bf16.mxu0 %v1315
    %1834 = vmatpush2.bf16.xpose.msra.mxu0 %v1314
    %1835 = vmatprep.subr.bf16.mxu0 %v1299
    %1836 = vmatpush2.bf16.xpose.msra.mxu0 %v1298
    %1837 = vmatprep.mubr.bf16.mxu0 %v383
    %1838 = vmatmul.mubr.bf16.gmra.mxu0 %v382
    %v1839 = vpop.f32.mrf.mxu0
    %v1840 = vadd.f32 %v1797, %v1839
    %v1841 = vpop.f32.mrf.mxu0
    %v1842 = vadd.f32 %v1799, %v1841
    %v1843 = vpop.f32.mrf.mxu0
    %v1844 = vadd.f32 %v1801, %v1843
    %v1845 = vpop.f32.mrf.mxu0
    %v1846 = vadd.f32 %v1803, %v1845
    %1847 = vdwg.mxu0
    %1848 = vmatprep.subr.bf16.mxu0 %v1285
    %1849 = vmatpush1.bf16.xpose.msra.mxu0 %v1284
    %1850 = vmatprep.subr.bf16.mxu0 %v1269
    %1851 = vmatpush1.bf16.xpose.msra.mxu0 %v1268
    %1852 = vmatprep.subr.bf16.mxu0 %v1253
    %1853 = vmatpush1.bf16.xpose.msra.mxu0 %v1252
    %1854 = vmatprep.subr.bf16.mxu0 %v1237
    %1855 = vmatpush1.bf16.xpose.msra.mxu0 %v1236
    %1856 = vmatprep.subr.bf16.mxu0 %v1221
    %1857 = vmatpush1.bf16.xpose.msra.mxu0 %v1220
    %1858 = vmatprep.subr.bf16.mxu0 %v1205
    %1859 = vmatpush1.bf16.xpose.msra.mxu0 %v1204
    %1860 = vmatprep.subr.bf16.mxu0 %v1189
    %1861 = vmatpush1.bf16.xpose.msra.mxu0 %v1188
    %1862 = vmatprep.subr.bf16.mxu0 %v1173
    %1863 = vmatpush1.bf16.xpose.msra.mxu0 %v1172
    %1864 = vmatprep.subr.bf16.mxu0 %v1413
    %1865 = vmatpush2.bf16.xpose.msra.mxu0 %v1412
    %1866 = vmatprep.subr.bf16.mxu0 %v1397
    %1867 = vmatpush2.bf16.xpose.msra.mxu0 %v1396
    %1868 = vmatprep.subr.bf16.mxu0 %v1381
    %1869 = vmatpush2.bf16.xpose.msra.mxu0 %v1380
    %1870 = vmatprep.subr.bf16.mxu0 %v1365
    %1871 = vmatpush2.bf16.xpose.msra.mxu0 %v1364
    %1872 = vmatprep.subr.bf16.mxu0 %v1349
    %1873 = vmatpush2.bf16.xpose.msra.mxu0 %v1348
    %1874 = vmatprep.subr.bf16.mxu0 %v1333
    %1875 = vmatpush2.bf16.xpose.msra.mxu0 %v1332
    %1876 = vmatprep.subr.bf16.mxu0 %v1317
    %1877 = vmatpush2.bf16.xpose.msra.mxu0 %v1316
    %1878 = vmatprep.subr.bf16.mxu0 %v1301
    %1879 = vmatpush2.bf16.xpose.msra.mxu0 %v1300
    %1880 = vmatprep.mubr.bf16.mxu0 %v385
    %1881 = vmatmul.mubr.bf16.gmra.mxu0 %v384
    %v1882 = vpop.f32.mrf.mxu0
    %v1883 = vadd.f32 %v1840, %v1882
    %v1884 = vpop.f32.mrf.mxu0
    %v1885 = vadd.f32 %v1842, %v1884
    %v1886 = vpop.f32.mrf.mxu0
    %v1887 = vadd.f32 %v1844, %v1886
    %v1888 = vpop.f32.mrf.mxu0
    %v1889 = vadd.f32 %v1846, %v1888
    %1890 = vdwg.mxu0
    %1891 = vmatprep.subr.bf16.mxu0 %v1287
    %1892 = vmatpush1.bf16.xpose.msra.mxu0 %v1286
    %1893 = vmatprep.subr.bf16.mxu0 %v1271
    %1894 = vmatpush1.bf16.xpose.msra.mxu0 %v1270
    %1895 = vmatprep.subr.bf16.mxu0 %v1255
    %1896 = vmatpush1.bf16.xpose.msra.mxu0 %v1254
    %1897 = vmatprep.subr.bf16.mxu0 %v1239
    %1898 = vmatpush1.bf16.xpose.msra.mxu0 %v1238
    %1899 = vmatprep.subr.bf16.mxu0 %v1223
    %1900 = vmatpush1.bf16.xpose.msra.mxu0 %v1222
    %1901 = vmatprep.subr.bf16.mxu0 %v1207
    %1902 = vmatpush1.bf16.xpose.msra.mxu0 %v1206
    %1903 = vmatprep.subr.bf16.mxu0 %v1191
    %1904 = vmatpush1.bf16.xpose.msra.mxu0 %v1190
    %1905 = vmatprep.subr.bf16.mxu0 %v1175
    %1906 = vmatpush1.bf16.xpose.msra.mxu0 %v1174
    %1907 = vmatprep.subr.bf16.mxu0 %v1415
    %1908 = vmatpush2.bf16.xpose.msra.mxu0 %v1414
    %1909 = vmatprep.subr.bf16.mxu0 %v1399
    %1910 = vmatpush2.bf16.xpose.msra.mxu0 %v1398
    %1911 = vmatprep.subr.bf16.mxu0 %v1383
    %1912 = vmatpush2.bf16.xpose.msra.mxu0 %v1382
    %1913 = vmatprep.subr.bf16.mxu0 %v1367
    %1914 = vmatpush2.bf16.xpose.msra.mxu0 %v1366
    %1915 = vmatprep.subr.bf16.mxu0 %v1351
    %1916 = vmatpush2.bf16.xpose.msra.mxu0 %v1350
    %1917 = vmatprep.subr.bf16.mxu0 %v1335
    %1918 = vmatpush2.bf16.xpose.msra.mxu0 %v1334
    %1919 = vmatprep.subr.bf16.mxu0 %v1319
    %1920 = vmatpush2.bf16.xpose.msra.mxu0 %v1318
    %1921 = vmatprep.subr.bf16.mxu0 %v1303
    %1922 = vmatpush2.bf16.xpose.msra.mxu0 %v1302
    %1923 = vmatprep.mubr.bf16.mxu0 %v387
    %1924 = vmatmul.mubr.bf16.gmra.mxu0 %v386
    %v1925 = vpop.f32.mrf.mxu0
    %v1926 = vadd.f32 %v1883, %v1925
    %v1927 = vpop.f32.mrf.mxu0
    %v1928 = vadd.f32 %v1885, %v1927
    %v1929 = vpop.f32.mrf.mxu0
    %v1930 = vadd.f32 %v1887, %v1929
    %v1931 = vpop.f32.mrf.mxu0
    %v1932 = vadd.f32 %v1889, %v1931
    %1933 = vdwg.mxu0
    %1934 = vmatprep.subr.bf16.mxu0 %v1289
    %1935 = vmatpush1.bf16.xpose.msra.mxu0 %v1288
    %1936 = vmatprep.subr.bf16.mxu0 %v1273
    %1937 = vmatpush1.bf16.xpose.msra.mxu0 %v1272
    %1938 = vmatprep.subr.bf16.mxu0 %v1257
    %1939 = vmatpush1.bf16.xpose.msra.mxu0 %v1256
    %1940 = vmatprep.subr.bf16.mxu0 %v1241
    %1941 = vmatpush1.bf16.xpose.msra.mxu0 %v1240
    %1942 = vmatprep.subr.bf16.mxu0 %v1225
    %1943 = vmatpush1.bf16.xpose.msra.mxu0 %v1224
    %1944 = vmatprep.subr.bf16.mxu0 %v1209
    %1945 = vmatpush1.bf16.xpose.msra.mxu0 %v1208
    %1946 = vmatprep.subr.bf16.mxu0 %v1193
    %1947 = vmatpush1.bf16.xpose.msra.mxu0 %v1192
    %1948 = vmatprep.subr.bf16.mxu0 %v1177
    %1949 = vmatpush1.bf16.xpose.msra.mxu0 %v1176
    %1950 = vmatprep.subr.bf16.mxu0 %v1417
    %1951 = vmatpush2.bf16.xpose.msra.mxu0 %v1416
    %1952 = vmatprep.subr.bf16.mxu0 %v1401
    %1953 = vmatpush2.bf16.xpose.msra.mxu0 %v1400
    %1954 = vmatprep.subr.bf16.mxu0 %v1385
    %1955 = vmatpush2.bf16.xpose.msra.mxu0 %v1384
    %1956 = vmatprep.subr.bf16.mxu0 %v1369
    %1957 = vmatpush2.bf16.xpose.msra.mxu0 %v1368
    %1958 = vmatprep.subr.bf16.mxu0 %v1353
    %1959 = vmatpush2.bf16.xpose.msra.mxu0 %v1352
    %1960 = vmatprep.subr.bf16.mxu0 %v1337
    %1961 = vmatpush2.bf16.xpose.msra.mxu0 %v1336
    %1962 = vmatprep.subr.bf16.mxu0 %v1321
    %1963 = vmatpush2.bf16.xpose.msra.mxu0 %v1320
    %1964 = vmatprep.subr.bf16.mxu0 %v1305
    %1965 = vmatpush2.bf16.xpose.msra.mxu0 %v1304
    %1966 = vmatprep.mubr.bf16.mxu0 %v389
    %1967 = vmatmul.mubr.bf16.gmra.mxu0 %v388
    %v1968 = vpop.f32.mrf.mxu0
    %v1969 = vadd.f32 %v1926, %v1968
    %v1970 = vpop.f32.mrf.mxu0
    %v1971 = vadd.f32 %v1928, %v1970
    %v1972 = vpop.f32.mrf.mxu0
    %v1973 = vadd.f32 %v1930, %v1972
    %v1974 = vpop.f32.mrf.mxu0
    %v1975 = vadd.f32 %v1932, %v1974
    %1976 = vdwg.mxu0
    %1977 = vmatprep.subr.bf16.mxu0 %v1291
    %1978 = vmatpush1.bf16.xpose.msra.mxu0 %v1290
    %1979 = vmatprep.subr.bf16.mxu0 %v1275
    %1980 = vmatpush1.bf16.xpose.msra.mxu0 %v1274
    %1981 = vmatprep.subr.bf16.mxu0 %v1259
    %1982 = vmatpush1.bf16.xpose.msra.mxu0 %v1258
    %1983 = vmatprep.subr.bf16.mxu0 %v1243
    %1984 = vmatpush1.bf16.xpose.msra.mxu0 %v1242
    %1985 = vmatprep.subr.bf16.mxu0 %v1227
    %1986 = vmatpush1.bf16.xpose.msra.mxu0 %v1226
    %1987 = vmatprep.subr.bf16.mxu0 %v1211
    %1988 = vmatpush1.bf16.xpose.msra.mxu0 %v1210
    %1989 = vmatprep.subr.bf16.mxu0 %v1195
    %1990 = vmatpush1.bf16.xpose.msra.mxu0 %v1194
    %1991 = vmatprep.subr.bf16.mxu0 %v1179
    %1992 = vmatpush1.bf16.xpose.msra.mxu0 %v1178
    %1993 = vmatprep.subr.bf16.mxu0 %v1419
    %1994 = vmatpush2.bf16.xpose.msra.mxu0 %v1418
    %1995 = vmatprep.subr.bf16.mxu0 %v1403
    %1996 = vmatpush2.bf16.xpose.msra.mxu0 %v1402
    %1997 = vmatprep.subr.bf16.mxu0 %v1387
    %1998 = vmatpush2.bf16.xpose.msra.mxu0 %v1386
    %1999 = vmatprep.subr.bf16.mxu0 %v1371
    %2000 = vmatpush2.bf16.xpose.msra.mxu0 %v1370
    %2001 = vmatprep.subr.bf16.mxu0 %v1355
    %2002 = vmatpush2.bf16.xpose.msra.mxu0 %v1354
    %2003 = vmatprep.subr.bf16.mxu0 %v1339
    %2004 = vmatpush2.bf16.xpose.msra.mxu0 %v1338
    %2005 = vmatprep.subr.bf16.mxu0 %v1323
    %2006 = vmatpush2.bf16.xpose.msra.mxu0 %v1322
    %2007 = vmatprep.subr.bf16.mxu0 %v1307
    %2008 = vmatpush2.bf16.xpose.msra.mxu0 %v1306
    %2009 = vmatprep.mubr.bf16.mxu0 %v391
    %2010 = vmatmul.mubr.bf16.gmra.mxu0 %v390
    %v2011 = vpop.f32.mrf.mxu0
    %v2012 = vadd.f32 %v1969, %v2011
    %v2013 = vpop.f32.mrf.mxu0
    %v2014 = vadd.f32 %v1971, %v2013
    %v2015 = vpop.f32.mrf.mxu0
    %v2016 = vadd.f32 %v1973, %v2015
    %v2017 = vpop.f32.mrf.mxu0
    %v2018 = vadd.f32 %v1975, %v2017
    %2019 = vdwg.mxu0
    %v2020 = vadd.f32 %v392, %v2012
    %v2021 = vadd.f32 %v393, %v2014
    %v2022 = vadd.f32 %v394, %v2016
    %v2023 = vadd.f32 %v395, %v2018
    %2024 = vst [vmem:[#allocation2] sm:$0xff] %v2020
    %2025 = vst [vmem:[#allocation2 + $0x8] sm:$0xff] %v2021
    %2026 = vst [vmem:[#allocation2 + $0x10] sm:$0xff] %v2022
    %2027 = vst [vmem:[#allocation2 + $0x18] sm:$0xff] %v2023
    %v2028 = vld [vmem:[%s4] sm:$0xff]
    %v2030 = vunpack.c.l.b16 %v2028
    %v2031 = vunpack.c.h.b16 %v2028
    %v2032 = vpack.c.b16 %v2030, %v2030
    %v2033 = vpack.c.b16 %v2031, %v2031
    %2036 = vmatprep.subr.bf16.mxu0 %v1277
    %2037 = vmatpush1.bf16.msra.mxu0 %v1276
    %2038 = vmatprep.subr.bf16.mxu0 %v1261
    %2039 = vmatpush1.bf16.msra.mxu0 %v1260
    %2040 = vmatprep.subr.bf16.mxu0 %v1245
    %2041 = vmatpush1.bf16.msra.mxu0 %v1244
    %2042 = vmatprep.subr.bf16.mxu0 %v1229
    %2043 = vmatpush1.bf16.msra.mxu0 %v1228
    %2044 = vmatprep.subr.bf16.mxu0 %v1213
    %2045 = vmatpush1.bf16.msra.mxu0 %v1212
    %2046 = vmatprep.subr.bf16.mxu0 %v1197
    %2047 = vmatpush1.bf16.msra.mxu0 %v1196
    %2048 = vmatprep.subr.bf16.mxu0 %v1181
    %2049 = vmatpush1.bf16.msra.mxu0 %v1180
    %2050 = vmatprep.subr.bf16.mxu0 %v1165
    %2051 = vmatpush1.bf16.msra.mxu0 %v1164
    %2052 = vmatprep.subr.bf16.mxu0 %v1405
    %2053 = vmatpush2.bf16.msra.mxu0 %v1404
    %2054 = vmatprep.subr.bf16.mxu0 %v1389
    %2055 = vmatpush2.bf16.msra.mxu0 %v1388
    %2056 = vmatprep.subr.bf16.mxu0 %v1373
    %2057 = vmatpush2.bf16.msra.mxu0 %v1372
    %2058 = vmatprep.subr.bf16.mxu0 %v1357
    %2059 = vmatpush2.bf16.msra.mxu0 %v1356
    %2060 = vmatprep.subr.bf16.mxu0 %v1341
    %2061 = vmatpush2.bf16.msra.mxu0 %v1340
    %2062 = vmatprep.subr.bf16.mxu0 %v1325
    %2063 = vmatpush2.bf16.msra.mxu0 %v1324
    %2064 = vmatprep.subr.bf16.mxu0 %v1309
    %2065 = vmatpush2.bf16.msra.mxu0 %v1308
    %2066 = vmatprep.subr.bf16.mxu0 %v1293
    %2067 = vmatpush2.bf16.msra.mxu0 %v1292
    %2068 = vmatprep.mubr.bf16.mxu0 %v2033
    %2069 = vmatmul.mubr.bf16.gmra.mxu0 %v2032
    %v2070 = vpop.f32.mrf.mxu0
    %v2071 = vadd.f32 0.0, %v2070
    %v2072 = vpop.f32.mrf.mxu0
    %v2073 = vadd.f32 0.0, %v2072
    %v2074 = vpop.f32.mrf.mxu0
    %v2075 = vpop.f32.mrf.mxu0
    %2076 = vdwg.mxu0
    %2077 = vmatprep.subr.bf16.mxu0 %v1279
    %2078 = vmatpush1.bf16.msra.mxu0 %v1278
    %2079 = vmatprep.subr.bf16.mxu0 %v1263
    %2080 = vmatpush1.bf16.msra.mxu0 %v1262
    %2081 = vmatprep.subr.bf16.mxu0 %v1247
    %2082 = vmatpush1.bf16.msra.mxu0 %v1246
    %2083 = vmatprep.subr.bf16.mxu0 %v1231
    %2084 = vmatpush1.bf16.msra.mxu0 %v1230
    %2085 = vmatprep.subr.bf16.mxu0 %v1215
    %2086 = vmatpush1.bf16.msra.mxu0 %v1214
    %2087 = vmatprep.subr.bf16.mxu0 %v1199
    %2088 = vmatpush1.bf16.msra.mxu0 %v1198
    %2089 = vmatprep.subr.bf16.mxu0 %v1183
    %2090 = vmatpush1.bf16.msra.mxu0 %v1182
    %2091 = vmatprep.subr.bf16.mxu0 %v1167
    %2092 = vmatpush1.bf16.msra.mxu0 %v1166
    %2093 = vmatprep.subr.bf16.mxu0 %v1407
    %2094 = vmatpush2.bf16.msra.mxu0 %v1406
    %2095 = vmatprep.subr.bf16.mxu0 %v1391
    %2096 = vmatpush2.bf16.msra.mxu0 %v1390
    %2097 = vmatprep.subr.bf16.mxu0 %v1375
    %2098 = vmatpush2.bf16.msra.mxu0 %v1374
    %2099 = vmatprep.subr.bf16.mxu0 %v1359
    %2100 = vmatpush2.bf16.msra.mxu0 %v1358
    %2101 = vmatprep.subr.bf16.mxu0 %v1343
    %2102 = vmatpush2.bf16.msra.mxu0 %v1342
    %2103 = vmatprep.subr.bf16.mxu0 %v1327
    %2104 = vmatpush2.bf16.msra.mxu0 %v1326
    %2105 = vmatprep.subr.bf16.mxu0 %v1311
    %2106 = vmatpush2.bf16.msra.mxu0 %v1310
    %2107 = vmatprep.subr.bf16.mxu0 %v1295
    %2108 = vmatpush2.bf16.msra.mxu0 %v1294
    %2109 = vmatprep.mubr.bf16.mxu0 %v2033
    %2110 = vmatmul.mubr.bf16.gmra.mxu0 %v2032
    %v2111 = vpop.f32.mrf.mxu0
    %v2112 = vadd.f32 0.0, %v2111
    %v2113 = vpop.f32.mrf.mxu0
    %v2114 = vadd.f32 0.0, %v2113
    %v2115 = vpop.f32.mrf.mxu0
    %v2116 = vpop.f32.mrf.mxu0
    %2117 = vdwg.mxu0
    %2118 = vmatprep.subr.bf16.mxu0 %v1281
    %2119 = vmatpush1.bf16.msra.mxu0 %v1280
    %2120 = vmatprep.subr.bf16.mxu0 %v1265
    %2121 = vmatpush1.bf16.msra.mxu0 %v1264
    %2122 = vmatprep.subr.bf16.mxu0 %v1249
    %2123 = vmatpush1.bf16.msra.mxu0 %v1248
    %2124 = vmatprep.subr.bf16.mxu0 %v1233
    %2125 = vmatpush1.bf16.msra.mxu0 %v1232
    %2126 = vmatprep.subr.bf16.mxu0 %v1217
    %2127 = vmatpush1.bf16.msra.mxu0 %v1216
    %2128 = vmatprep.subr.bf16.mxu0 %v1201
    %2129 = vmatpush1.bf16.msra.mxu0 %v1200
    %2130 = vmatprep.subr.bf16.mxu0 %v1185
    %2131 = vmatpush1.bf16.msra.mxu0 %v1184
    %2132 = vmatprep.subr.bf16.mxu0 %v1169
    %2133 = vmatpush1.bf16.msra.mxu0 %v1168
    %2134 = vmatprep.subr.bf16.mxu0 %v1409
    %2135 = vmatpush2.bf16.msra.mxu0 %v1408
    %2136 = vmatprep.subr.bf16.mxu0 %v1393
    %2137 = vmatpush2.bf16.msra.mxu0 %v1392
    %2138 = vmatprep.subr.bf16.mxu0 %v1377
    %2139 = vmatpush2.bf16.msra.mxu0 %v1376
    %2140 = vmatprep.subr.bf16.mxu0 %v1361
    %2141 = vmatpush2.bf16.msra.mxu0 %v1360
    %2142 = vmatprep.subr.bf16.mxu0 %v1345
    %2143 = vmatpush2.bf16.msra.mxu0 %v1344
    %2144 = vmatprep.subr.bf16.mxu0 %v1329
    %2145 = vmatpush2.bf16.msra.mxu0 %v1328
    %2146 = vmatprep.subr.bf16.mxu0 %v1313
    %2147 = vmatpush2.bf16.msra.mxu0 %v1312
    %2148 = vmatprep.subr.bf16.mxu0 %v1297
    %2149 = vmatpush2.bf16.msra.mxu0 %v1296
    %2150 = vmatprep.mubr.bf16.mxu0 %v2033
    %2151 = vmatmul.mubr.bf16.gmra.mxu0 %v2032
    %v2152 = vpop.f32.mrf.mxu0
    %v2153 = vadd.f32 0.0, %v2152
    %v2154 = vpop.f32.mrf.mxu0
    %v2155 = vadd.f32 0.0, %v2154
    %v2156 = vpop.f32.mrf.mxu0
    %v2157 = vpop.f32.mrf.mxu0
    %2158 = vdwg.mxu0
    %2159 = vmatprep.subr.bf16.mxu0 %v1283
    %2160 = vmatpush1.bf16.msra.mxu0 %v1282
    %2161 = vmatprep.subr.bf16.mxu0 %v1267
    %2162 = vmatpush1.bf16.msra.mxu0 %v1266
    %2163 = vmatprep.subr.bf16.mxu0 %v1251
    %2164 = vmatpush1.bf16.msra.mxu0 %v1250
    %2165 = vmatprep.subr.bf16.mxu0 %v1235
    %2166 = vmatpush1.bf16.msra.mxu0 %v1234
    %2167 = vmatprep.subr.bf16.mxu0 %v1219
    %2168 = vmatpush1.bf16.msra.mxu0 %v1218
    %2169 = vmatprep.subr.bf16.mxu0 %v1203
    %2170 = vmatpush1.bf16.msra.mxu0 %v1202
    %2171 = vmatprep.subr.bf16.mxu0 %v1187
    %2172 = vmatpush1.bf16.msra.mxu0 %v1186
    %2173 = vmatprep.subr.bf16.mxu0 %v1171
    %2174 = vmatpush1.bf16.msra.mxu0 %v1170
    %2175 = vmatprep.subr.bf16.mxu0 %v1411
    %2176 = vmatpush2.bf16.msra.mxu0 %v1410
    %2177 = vmatprep.subr.bf16.mxu0 %v1395
    %2178 = vmatpush2.bf16.msra.mxu0 %v1394
    %2179 = vmatprep.subr.bf16.mxu0 %v1379
    %2180 = vmatpush2.bf16.msra.mxu0 %v1378
    %2181 = vmatprep.subr.bf16.mxu0 %v1363
    %2182 = vmatpush2.bf16.msra.mxu0 %v1362
    %2183 = vmatprep.subr.bf16.mxu0 %v1347
    %2184 = vmatpush2.bf16.msra.mxu0 %v1346
    %2185 = vmatprep.subr.bf16.mxu0 %v1331
    %2186 = vmatpush2.bf16.msra.mxu0 %v1330
    %2187 = vmatprep.subr.bf16.mxu0 %v1315
    %2188 = vmatpush2.bf16.msra.mxu0 %v1314
    %2189 = vmatprep.subr.bf16.mxu0 %v1299
    %2190 = vmatpush2.bf16.msra.mxu0 %v1298
    %2191 = vmatprep.mubr.bf16.mxu0 %v2033
    %2192 = vmatmul.mubr.bf16.gmra.mxu0 %v2032
    %v2193 = vpop.f32.mrf.mxu0
    %v2194 = vadd.f32 0.0, %v2193
    %v2195 = vpop.f32.mrf.mxu0
    %v2196 = vadd.f32 0.0, %v2195
    %v2197 = vpop.f32.mrf.mxu0
    %v2198 = vpop.f32.mrf.mxu0
    %2199 = vdwg.mxu0
    %2200 = vmatprep.subr.bf16.mxu0 %v1285
    %2201 = vmatpush1.bf16.msra.mxu0 %v1284
    %2202 = vmatprep.subr.bf16.mxu0 %v1269
    %2203 = vmatpush1.bf16.msra.mxu0 %v1268
    %2204 = vmatprep.subr.bf16.mxu0 %v1253
    %2205 = vmatpush1.bf16.msra.mxu0 %v1252
    %2206 = vmatprep.subr.bf16.mxu0 %v1237
    %2207 = vmatpush1.bf16.msra.mxu0 %v1236
    %2208 = vmatprep.subr.bf16.mxu0 %v1221
    %2209 = vmatpush1.bf16.msra.mxu0 %v1220
    %2210 = vmatprep.subr.bf16.mxu0 %v1205
    %2211 = vmatpush1.bf16.msra.mxu0 %v1204
    %2212 = vmatprep.subr.bf16.mxu0 %v1189
    %2213 = vmatpush1.bf16.msra.mxu0 %v1188
    %2214 = vmatprep.subr.bf16.mxu0 %v1173
    %2215 = vmatpush1.bf16.msra.mxu0 %v1172
    %2216 = vmatprep.subr.bf16.mxu0 %v1413
    %2217 = vmatpush2.bf16.msra.mxu0 %v1412
    %2218 = vmatprep.subr.bf16.mxu0 %v1397
    %2219 = vmatpush2.bf16.msra.mxu0 %v1396
    %2220 = vmatprep.subr.bf16.mxu0 %v1381
    %2221 = vmatpush2.bf16.msra.mxu0 %v1380
    %2222 = vmatprep.subr.bf16.mxu0 %v1365
    %2223 = vmatpush2.bf16.msra.mxu0 %v1364
    %2224 = vmatprep.subr.bf16.mxu0 %v1349
    %2225 = vmatpush2.bf16.msra.mxu0 %v1348
    %2226 = vmatprep.subr.bf16.mxu0 %v1333
    %2227 = vmatpush2.bf16.msra.mxu0 %v1332
    %2228 = vmatprep.subr.bf16.mxu0 %v1317
    %2229 = vmatpush2.bf16.msra.mxu0 %v1316
    %2230 = vmatprep.subr.bf16.mxu0 %v1301
    %2231 = vmatpush2.bf16.msra.mxu0 %v1300
    %2232 = vmatprep.mubr.bf16.mxu0 %v2033
    %2233 = vmatmul.mubr.bf16.gmra.mxu0 %v2032
    %v2234 = vpop.f32.mrf.mxu0
    %v2235 = vadd.f32 0.0, %v2234
    %v2236 = vpop.f32.mrf.mxu0
    %v2237 = vadd.f32 0.0, %v2236
    %v2238 = vpop.f32.mrf.mxu0
    %v2239 = vpop.f32.mrf.mxu0
    %2240 = vdwg.mxu0
    %2241 = vmatprep.subr.bf16.mxu0 %v1287
    %2242 = vmatpush1.bf16.msra.mxu0 %v1286
    %2243 = vmatprep.subr.bf16.mxu0 %v1271
    %2244 = vmatpush1.bf16.msra.mxu0 %v1270
    %2245 = vmatprep.subr.bf16.mxu0 %v1255
    %2246 = vmatpush1.bf16.msra.mxu0 %v1254
    %2247 = vmatprep.subr.bf16.mxu0 %v1239
    %2248 = vmatpush1.bf16.msra.mxu0 %v1238
    %2249 = vmatprep.subr.bf16.mxu0 %v1223
    %2250 = vmatpush1.bf16.msra.mxu0 %v1222
    %2251 = vmatprep.subr.bf16.mxu0 %v1207
    %2252 = vmatpush1.bf16.msra.mxu0 %v1206
    %2253 = vmatprep.subr.bf16.mxu0 %v1191
    %2254 = vmatpush1.bf16.msra.mxu0 %v1190
    %2255 = vmatprep.subr.bf16.mxu0 %v1175
    %2256 = vmatpush1.bf16.msra.mxu0 %v1174
    %2257 = vmatprep.subr.bf16.mxu0 %v1415
    %2258 = vmatpush2.bf16.msra.mxu0 %v1414
    %2259 = vmatprep.subr.bf16.mxu0 %v1399
    %2260 = vmatpush2.bf16.msra.mxu0 %v1398
    %2261 = vmatprep.subr.bf16.mxu0 %v1383
    %2262 = vmatpush2.bf16.msra.mxu0 %v1382
    %2263 = vmatprep.subr.bf16.mxu0 %v1367
    %2264 = vmatpush2.bf16.msra.mxu0 %v1366
    %2265 = vmatprep.subr.bf16.mxu0 %v1351
    %2266 = vmatpush2.bf16.msra.mxu0 %v1350
    %2267 = vmatprep.subr.bf16.mxu0 %v1335
    %2268 = vmatpush2.bf16.msra.mxu0 %v1334
    %2269 = vmatprep.subr.bf16.mxu0 %v1319
    %2270 = vmatpush2.bf16.msra.mxu0 %v1318
    %2271 = vmatprep.subr.bf16.mxu0 %v1303
    %2272 = vmatpush2.bf16.msra.mxu0 %v1302
    %2273 = vmatprep.mubr.bf16.mxu0 %v2033
    %2274 = vmatmul.mubr.bf16.gmra.mxu0 %v2032
    %v2275 = vpop.f32.mrf.mxu0
    %v2276 = vadd.f32 0.0, %v2275
    %v2277 = vpop.f32.mrf.mxu0
    %v2278 = vadd.f32 0.0, %v2277
    %v2279 = vpop.f32.mrf.mxu0
    %v2280 = vpop.f32.mrf.mxu0
    %2281 = vdwg.mxu0
    %2282 = vmatprep.subr.bf16.mxu0 %v1289
    %2283 = vmatpush1.bf16.msra.mxu0 %v1288
    %2284 = vmatprep.subr.bf16.mxu0 %v1273
    %2285 = vmatpush1.bf16.msra.mxu0 %v1272
    %2286 = vmatprep.subr.bf16.mxu0 %v1257
    %2287 = vmatpush1.bf16.msra.mxu0 %v1256
    %2288 = vmatprep.subr.bf16.mxu0 %v1241
    %2289 = vmatpush1.bf16.msra.mxu0 %v1240
    %2290 = vmatprep.subr.bf16.mxu0 %v1225
    %2291 = vmatpush1.bf16.msra.mxu0 %v1224
    %2292 = vmatprep.subr.bf16.mxu0 %v1209
    %2293 = vmatpush1.bf16.msra.mxu0 %v1208
    %2294 = vmatprep.subr.bf16.mxu0 %v1193
    %2295 = vmatpush1.bf16.msra.mxu0 %v1192
    %2296 = vmatprep.subr.bf16.mxu0 %v1177
    %2297 = vmatpush1.bf16.msra.mxu0 %v1176
    %2298 = vmatprep.subr.bf16.mxu0 %v1417
    %2299 = vmatpush2.bf16.msra.mxu0 %v1416
    %2300 = vmatprep.subr.bf16.mxu0 %v1401
    %2301 = vmatpush2.bf16.msra.mxu0 %v1400
    %2302 = vmatprep.subr.bf16.mxu0 %v1385
    %2303 = vmatpush2.bf16.msra.mxu0 %v1384
    %2304 = vmatprep.subr.bf16.mxu0 %v1369
    %2305 = vmatpush2.bf16.msra.mxu0 %v1368
    %2306 = vmatprep.subr.bf16.mxu0 %v1353
    %2307 = vmatpush2.bf16.msra.mxu0 %v1352
    %2308 = vmatprep.subr.bf16.mxu0 %v1337
    %2309 = vmatpush2.bf16.msra.mxu0 %v1336
    %2310 = vmatprep.subr.bf16.mxu0 %v1321
    %2311 = vmatpush2.bf16.msra.mxu0 %v1320
    %2312 = vmatprep.subr.bf16.mxu0 %v1305
    %2313 = vmatpush2.bf16.msra.mxu0 %v1304
    %2314 = vmatprep.mubr.bf16.mxu0 %v2033
    %2315 = vmatmul.mubr.bf16.gmra.mxu0 %v2032
    %v2316 = vpop.f32.mrf.mxu0
    %v2317 = vadd.f32 0.0, %v2316
    %v2318 = vpop.f32.mrf.mxu0
    %v2319 = vadd.f32 0.0, %v2318
    %v2320 = vpop.f32.mrf.mxu0
    %v2321 = vpop.f32.mrf.mxu0
    %2322 = vdwg.mxu0
    %2323 = vmatprep.subr.bf16.mxu0 %v1291
    %2324 = vmatpush1.bf16.msra.mxu0 %v1290
    %2325 = vmatprep.subr.bf16.mxu0 %v1275
    %2326 = vmatpush1.bf16.msra.mxu0 %v1274
    %2327 = vmatprep.subr.bf16.mxu0 %v1259
    %2328 = vmatpush1.bf16.msra.mxu0 %v1258
    %2329 = vmatprep.subr.bf16.mxu0 %v1243
    %2330 = vmatpush1.bf16.msra.mxu0 %v1242
    %2331 = vmatprep.subr.bf16.mxu0 %v1227
    %2332 = vmatpush1.bf16.msra.mxu0 %v1226
    %2333 = vmatprep.subr.bf16.mxu0 %v1211
    %2334 = vmatpush1.bf16.msra.mxu0 %v1210
    %2335 = vmatprep.subr.bf16.mxu0 %v1195
    %2336 = vmatpush1.bf16.msra.mxu0 %v1194
    %2337 = vmatprep.subr.bf16.mxu0 %v1179
    %2338 = vmatpush1.bf16.msra.mxu0 %v1178
    %2339 = vmatprep.subr.bf16.mxu0 %v1419
    %2340 = vmatpush2.bf16.msra.mxu0 %v1418
    %2341 = vmatprep.subr.bf16.mxu0 %v1403
    %2342 = vmatpush2.bf16.msra.mxu0 %v1402
    %2343 = vmatprep.subr.bf16.mxu0 %v1387
    %2344 = vmatpush2.bf16.msra.mxu0 %v1386
    %2345 = vmatprep.subr.bf16.mxu0 %v1371
    %2346 = vmatpush2.bf16.msra.mxu0 %v1370
    %2347 = vmatprep.subr.bf16.mxu0 %v1355
    %2348 = vmatpush2.bf16.msra.mxu0 %v1354
    %2349 = vmatprep.subr.bf16.mxu0 %v1339
    %2350 = vmatpush2.bf16.msra.mxu0 %v1338
    %2351 = vmatprep.subr.bf16.mxu0 %v1323
    %2352 = vmatpush2.bf16.msra.mxu0 %v1322
    %2353 = vmatprep.subr.bf16.mxu0 %v1307
    %2354 = vmatpush2.bf16.msra.mxu0 %v1306
    %2355 = vmatprep.mubr.bf16.mxu0 %v2033
    %2356 = vmatmul.mubr.bf16.gmra.mxu0 %v2032
    %v2357 = vpop.f32.mrf.mxu0
    %v2358 = vadd.f32 0.0, %v2357
    %v2359 = vpop.f32.mrf.mxu0
    %v2360 = vadd.f32 0.0, %v2359
    %v2361 = vpop.f32.mrf.mxu0
    %v2362 = vpop.f32.mrf.mxu0
    %2363 = vdwg.mxu0
    %v2364 = vld [vmem:[#allocation3] sm:$0xff]
    %v2365 = vld [vmem:[#allocation3 + $0x8] sm:$0xff]
    %v2366 = vpack.c.bf16 %v2071, %v2071
    %v2367 = vpack.c.bf16 %v2073, %v2073
    %v2368 = vpack.c.bf16 %v2112, %v2112
    %v2369 = vpack.c.bf16 %v2114, %v2114
    %v2370 = vpack.c.bf16 %v2153, %v2153
    %v2371 = vpack.c.bf16 %v2155, %v2155
    %v2372 = vpack.c.bf16 %v2194, %v2194
    %v2373 = vpack.c.bf16 %v2196, %v2196
    %v2374 = vpack.c.bf16 %v2235, %v2235
    %v2375 = vpack.c.bf16 %v2237, %v2237
    %v2376 = vpack.c.bf16 %v2276, %v2276
    %v2377 = vpack.c.bf16 %v2278, %v2278
    %v2378 = vpack.c.bf16 %v2317, %v2317
    %v2379 = vpack.c.bf16 %v2319, %v2319
    %v2380 = vpack.c.bf16 %v2358, %v2358
    %v2381 = vpack.c.bf16 %v2360, %v2360
    %2382 = vmatprep.subr.bf16.mxu0 %v1277
    %2383 = vmatpush1.bf16.xpose.msra.mxu0 %v1276
    %2384 = vmatprep.subr.bf16.mxu0 %v1261
    %2385 = vmatpush1.bf16.xpose.msra.mxu0 %v1260
    %2386 = vmatprep.subr.bf16.mxu0 %v1245
    %2387 = vmatpush1.bf16.xpose.msra.mxu0 %v1244
    %2388 = vmatprep.subr.bf16.mxu0 %v1229
    %2389 = vmatpush1.bf16.xpose.msra.mxu0 %v1228
    %2390 = vmatprep.subr.bf16.mxu0 %v1213
    %2391 = vmatpush1.bf16.xpose.msra.mxu0 %v1212
    %2392 = vmatprep.subr.bf16.mxu0 %v1197
    %2393 = vmatpush1.bf16.xpose.msra.mxu0 %v1196
    %2394 = vmatprep.subr.bf16.mxu0 %v1181
    %2395 = vmatpush1.bf16.xpose.msra.mxu0 %v1180
    %2396 = vmatprep.subr.bf16.mxu0 %v1165
    %2397 = vmatpush1.bf16.xpose.msra.mxu0 %v1164
    %2398 = vmatprep.subr.bf16.mxu0 %v1405
    %2399 = vmatpush2.bf16.xpose.msra.mxu0 %v1404
    %2400 = vmatprep.subr.bf16.mxu0 %v1389
    %2401 = vmatpush2.bf16.xpose.msra.mxu0 %v1388
    %2402 = vmatprep.subr.bf16.mxu0 %v1373
    %2403 = vmatpush2.bf16.xpose.msra.mxu0 %v1372
    %2404 = vmatprep.subr.bf16.mxu0 %v1357
    %2405 = vmatpush2.bf16.xpose.msra.mxu0 %v1356
    %2406 = vmatprep.subr.bf16.mxu0 %v1341
    %2407 = vmatpush2.bf16.xpose.msra.mxu0 %v1340
    %2408 = vmatprep.subr.bf16.mxu0 %v1325
    %2409 = vmatpush2.bf16.xpose.msra.mxu0 %v1324
    %2410 = vmatprep.subr.bf16.mxu0 %v1309
    %2411 = vmatpush2.bf16.xpose.msra.mxu0 %v1308
    %2412 = vmatprep.subr.bf16.mxu0 %v1293
    %2413 = vmatpush2.bf16.xpose.msra.mxu0 %v1292
    %2414 = vmatprep.mubr.bf16.mxu0 %v2367
    %2415 = vmatmul.mubr.bf16.gmra.mxu0 %v2366
    %v2416 = vpop.f32.mrf.mxu0
    %v2417 = vadd.f32 0.0, %v2416
    %v2418 = vpop.f32.mrf.mxu0
    %v2419 = vadd.f32 0.0, %v2418
    %v2420 = vpop.f32.mrf.mxu0
    %v2421 = vpop.f32.mrf.mxu0
    %2422 = vdwg.mxu0
    %2423 = vmatprep.subr.bf16.mxu0 %v1279
    %2424 = vmatpush1.bf16.xpose.msra.mxu0 %v1278
    %2425 = vmatprep.subr.bf16.mxu0 %v1263
    %2426 = vmatpush1.bf16.xpose.msra.mxu0 %v1262
    %2427 = vmatprep.subr.bf16.mxu0 %v1247
    %2428 = vmatpush1.bf16.xpose.msra.mxu0 %v1246
    %2429 = vmatprep.subr.bf16.mxu0 %v1231
    %2430 = vmatpush1.bf16.xpose.msra.mxu0 %v1230
    %2431 = vmatprep.subr.bf16.mxu0 %v1215
    %2432 = vmatpush1.bf16.xpose.msra.mxu0 %v1214
    %2433 = vmatprep.subr.bf16.mxu0 %v1199
    %2434 = vmatpush1.bf16.xpose.msra.mxu0 %v1198
    %2435 = vmatprep.subr.bf16.mxu0 %v1183
    %2436 = vmatpush1.bf16.xpose.msra.mxu0 %v1182
    %2437 = vmatprep.subr.bf16.mxu0 %v1167
    %2438 = vmatpush1.bf16.xpose.msra.mxu0 %v1166
    %2439 = vmatprep.subr.bf16.mxu0 %v1407
    %2440 = vmatpush2.bf16.xpose.msra.mxu0 %v1406
    %2441 = vmatprep.subr.bf16.mxu0 %v1391
    %2442 = vmatpush2.bf16.xpose.msra.mxu0 %v1390
    %2443 = vmatprep.subr.bf16.mxu0 %v1375
    %2444 = vmatpush2.bf16.xpose.msra.mxu0 %v1374
    %2445 = vmatprep.subr.bf16.mxu0 %v1359
    %2446 = vmatpush2.bf16.xpose.msra.mxu0 %v1358
    %2447 = vmatprep.subr.bf16.mxu0 %v1343
    %2448 = vmatpush2.bf16.xpose.msra.mxu0 %v1342
    %2449 = vmatprep.subr.bf16.mxu0 %v1327
    %2450 = vmatpush2.bf16.xpose.msra.mxu0 %v1326
    %2451 = vmatprep.subr.bf16.mxu0 %v1311
    %2452 = vmatpush2.bf16.xpose.msra.mxu0 %v1310
    %2453 = vmatprep.subr.bf16.mxu0 %v1295
    %2454 = vmatpush2.bf16.xpose.msra.mxu0 %v1294
    %2455 = vmatprep.mubr.bf16.mxu0 %v2369
    %2456 = vmatmul.mubr.bf16.gmra.mxu0 %v2368
    %v2457 = vpop.f32.mrf.mxu0
    %v2458 = vadd.f32 %v2417, %v2457
    %v2459 = vpop.f32.mrf.mxu0
    %v2460 = vadd.f32 %v2419, %v2459
    %v2461 = vpop.f32.mrf.mxu0
    %v2462 = vpop.f32.mrf.mxu0
    %2463 = vdwg.mxu0
    %2464 = vmatprep.subr.bf16.mxu0 %v1281
    %2465 = vmatpush1.bf16.xpose.msra.mxu0 %v1280
    %2466 = vmatprep.subr.bf16.mxu0 %v1265
    %2467 = vmatpush1.bf16.xpose.msra.mxu0 %v1264
    %2468 = vmatprep.subr.bf16.mxu0 %v1249
    %2469 = vmatpush1.bf16.xpose.msra.mxu0 %v1248
    %2470 = vmatprep.subr.bf16.mxu0 %v1233
    %2471 = vmatpush1.bf16.xpose.msra.mxu0 %v1232
    %2472 = vmatprep.subr.bf16.mxu0 %v1217
    %2473 = vmatpush1.bf16.xpose.msra.mxu0 %v1216
    %2474 = vmatprep.subr.bf16.mxu0 %v1201
    %2475 = vmatpush1.bf16.xpose.msra.mxu0 %v1200
    %2476 = vmatprep.subr.bf16.mxu0 %v1185
    %2477 = vmatpush1.bf16.xpose.msra.mxu0 %v1184
    %2478 = vmatprep.subr.bf16.mxu0 %v1169
    %2479 = vmatpush1.bf16.xpose.msra.mxu0 %v1168
    %2480 = vmatprep.subr.bf16.mxu0 %v1409
    %2481 = vmatpush2.bf16.xpose.msra.mxu0 %v1408
    %2482 = vmatprep.subr.bf16.mxu0 %v1393
    %2483 = vmatpush2.bf16.xpose.msra.mxu0 %v1392
    %2484 = vmatprep.subr.bf16.mxu0 %v1377
    %2485 = vmatpush2.bf16.xpose.msra.mxu0 %v1376
    %2486 = vmatprep.subr.bf16.mxu0 %v1361
    %2487 = vmatpush2.bf16.xpose.msra.mxu0 %v1360
    %2488 = vmatprep.subr.bf16.mxu0 %v1345
    %2489 = vmatpush2.bf16.xpose.msra.mxu0 %v1344
    %2490 = vmatprep.subr.bf16.mxu0 %v1329
    %2491 = vmatpush2.bf16.xpose.msra.mxu0 %v1328
    %2492 = vmatprep.subr.bf16.mxu0 %v1313
    %2493 = vmatpush2.bf16.xpose.msra.mxu0 %v1312
    %2494 = vmatprep.subr.bf16.mxu0 %v1297
    %2495 = vmatpush2.bf16.xpose.msra.mxu0 %v1296
    %2496 = vmatprep.mubr.bf16.mxu0 %v2371
    %2497 = vmatmul.mubr.bf16.gmra.mxu0 %v2370
    %v2498 = vpop.f32.mrf.mxu0
    %v2499 = vadd.f32 %v2458, %v2498
    %v2500 = vpop.f32.mrf.mxu0
    %v2501 = vadd.f32 %v2460, %v2500
    %v2502 = vpop.f32.mrf.mxu0
    %v2503 = vpop.f32.mrf.mxu0
    %2504 = vdwg.mxu0
    %2505 = vmatprep.subr.bf16.mxu0 %v1283
    %2506 = vmatpush1.bf16.xpose.msra.mxu0 %v1282
    %2507 = vmatprep.subr.bf16.mxu0 %v1267
    %2508 = vmatpush1.bf16.xpose.msra.mxu0 %v1266
    %2509 = vmatprep.subr.bf16.mxu0 %v1251
    %2510 = vmatpush1.bf16.xpose.msra.mxu0 %v1250
    %2511 = vmatprep.subr.bf16.mxu0 %v1235
    %2512 = vmatpush1.bf16.xpose.msra.mxu0 %v1234
    %2513 = vmatprep.subr.bf16.mxu0 %v1219
    %2514 = vmatpush1.bf16.xpose.msra.mxu0 %v1218
    %2515 = vmatprep.subr.bf16.mxu0 %v1203
    %2516 = vmatpush1.bf16.xpose.msra.mxu0 %v1202
    %2517 = vmatprep.subr.bf16.mxu0 %v1187
    %2518 = vmatpush1.bf16.xpose.msra.mxu0 %v1186
    %2519 = vmatprep.subr.bf16.mxu0 %v1171
    %2520 = vmatpush1.bf16.xpose.msra.mxu0 %v1170
    %2521 = vmatprep.subr.bf16.mxu0 %v1411
    %2522 = vmatpush2.bf16.xpose.msra.mxu0 %v1410
    %2523 = vmatprep.subr.bf16.mxu0 %v1395
    %2524 = vmatpush2.bf16.xpose.msra.mxu0 %v1394
    %2525 = vmatprep.subr.bf16.mxu0 %v1379
    %2526 = vmatpush2.bf16.xpose.msra.mxu0 %v1378
    %2527 = vmatprep.subr.bf16.mxu0 %v1363
    %2528 = vmatpush2.bf16.xpose.msra.mxu0 %v1362
    %2529 = vmatprep.subr.bf16.mxu0 %v1347
    %2530 = vmatpush2.bf16.xpose.msra.mxu0 %v1346
    %2531 = vmatprep.subr.bf16.mxu0 %v1331
    %2532 = vmatpush2.bf16.xpose.msra.mxu0 %v1330
    %2533 = vmatprep.subr.bf16.mxu0 %v1315
    %2534 = vmatpush2.bf16.xpose.msra.mxu0 %v1314
    %2535 = vmatprep.subr.bf16.mxu0 %v1299
    %2536 = vmatpush2.bf16.xpose.msra.mxu0 %v1298
    %2537 = vmatprep.mubr.bf16.mxu0 %v2373
    %2538 = vmatmul.mubr.bf16.gmra.mxu0 %v2372
    %v2539 = vpop.f32.mrf.mxu0
    %v2540 = vadd.f32 %v2499, %v2539
    %v2541 = vpop.f32.mrf.mxu0
    %v2542 = vadd.f32 %v2501, %v2541
    %v2543 = vpop.f32.mrf.mxu0
    %v2544 = vpop.f32.mrf.mxu0
    %2545 = vdwg.mxu0
    %2546 = vmatprep.subr.bf16.mxu0 %v1285
    %2547 = vmatpush1.bf16.xpose.msra.mxu0 %v1284
    %2548 = vmatprep.subr.bf16.mxu0 %v1269
    %2549 = vmatpush1.bf16.xpose.msra.mxu0 %v1268
    %2550 = vmatprep.subr.bf16.mxu0 %v1253
    %2551 = vmatpush1.bf16.xpose.msra.mxu0 %v1252
    %2552 = vmatprep.subr.bf16.mxu0 %v1237
    %2553 = vmatpush1.bf16.xpose.msra.mxu0 %v1236
    %2554 = vmatprep.subr.bf16.mxu0 %v1221
    %2555 = vmatpush1.bf16.xpose.msra.mxu0 %v1220
    %2556 = vmatprep.subr.bf16.mxu0 %v1205
    %2557 = vmatpush1.bf16.xpose.msra.mxu0 %v1204
    %2558 = vmatprep.subr.bf16.mxu0 %v1189
    %2559 = vmatpush1.bf16.xpose.msra.mxu0 %v1188
    %2560 = vmatprep.subr.bf16.mxu0 %v1173
    %2561 = vmatpush1.bf16.xpose.msra.mxu0 %v1172
    %2562 = vmatprep.subr.bf16.mxu0 %v1413
    %2563 = vmatpush2.bf16.xpose.msra.mxu0 %v1412
    %2564 = vmatprep.subr.bf16.mxu0 %v1397
    %2565 = vmatpush2.bf16.xpose.msra.mxu0 %v1396
    %2566 = vmatprep.subr.bf16.mxu0 %v1381
    %2567 = vmatpush2.bf16.xpose.msra.mxu0 %v1380
    %2568 = vmatprep.subr.bf16.mxu0 %v1365
    %2569 = vmatpush2.bf16.xpose.msra.mxu0 %v1364
    %2570 = vmatprep.subr.bf16.mxu0 %v1349
    %2571 = vmatpush2.bf16.xpose.msra.mxu0 %v1348
    %2572 = vmatprep.subr.bf16.mxu0 %v1333
    %2573 = vmatpush2.bf16.xpose.msra.mxu0 %v1332
    %2574 = vmatprep.subr.bf16.mxu0 %v1317
    %2575 = vmatpush2.bf16.xpose.msra.mxu0 %v1316
    %2576 = vmatprep.subr.bf16.mxu0 %v1301
    %2577 = vmatpush2.bf16.xpose.msra.mxu0 %v1300
    %2578 = vmatprep.mubr.bf16.mxu0 %v2375
    %2579 = vmatmul.mubr.bf16.gmra.mxu0 %v2374
    %v2580 = vpop.f32.mrf.mxu0
    %v2581 = vadd.f32 %v2540, %v2580
    %v2582 = vpop.f32.mrf.mxu0
    %v2583 = vadd.f32 %v2542, %v2582
    %v2584 = vpop.f32.mrf.mxu0
    %v2585 = vpop.f32.mrf.mxu0
    %2586 = vdwg.mxu0
    %2587 = vmatprep.subr.bf16.mxu0 %v1287
    %2588 = vmatpush1.bf16.xpose.msra.mxu0 %v1286
    %2589 = vmatprep.subr.bf16.mxu0 %v1271
    %2590 = vmatpush1.bf16.xpose.msra.mxu0 %v1270
    %2591 = vmatprep.subr.bf16.mxu0 %v1255
    %2592 = vmatpush1.bf16.xpose.msra.mxu0 %v1254
    %2593 = vmatprep.subr.bf16.mxu0 %v1239
    %2594 = vmatpush1.bf16.xpose.msra.mxu0 %v1238
    %2595 = vmatprep.subr.bf16.mxu0 %v1223
    %2596 = vmatpush1.bf16.xpose.msra.mxu0 %v1222
    %2597 = vmatprep.subr.bf16.mxu0 %v1207
    %2598 = vmatpush1.bf16.xpose.msra.mxu0 %v1206
    %2599 = vmatprep.subr.bf16.mxu0 %v1191
    %2600 = vmatpush1.bf16.xpose.msra.mxu0 %v1190
    %2601 = vmatprep.subr.bf16.mxu0 %v1175
    %2602 = vmatpush1.bf16.xpose.msra.mxu0 %v1174
    %2603 = vmatprep.subr.bf16.mxu0 %v1415
    %2604 = vmatpush2.bf16.xpose.msra.mxu0 %v1414
    %2605 = vmatprep.subr.bf16.mxu0 %v1399
    %2606 = vmatpush2.bf16.xpose.msra.mxu0 %v1398
    %2607 = vmatprep.subr.bf16.mxu0 %v1383
    %2608 = vmatpush2.bf16.xpose.msra.mxu0 %v1382
    %2609 = vmatprep.subr.bf16.mxu0 %v1367
    %2610 = vmatpush2.bf16.xpose.msra.mxu0 %v1366
    %2611 = vmatprep.subr.bf16.mxu0 %v1351
    %2612 = vmatpush2.bf16.xpose.msra.mxu0 %v1350
    %2613 = vmatprep.subr.bf16.mxu0 %v1335
    %2614 = vmatpush2.bf16.xpose.msra.mxu0 %v1334
    %2615 = vmatprep.subr.bf16.mxu0 %v1319
    %2616 = vmatpush2.bf16.xpose.msra.mxu0 %v1318
    %2617 = vmatprep.subr.bf16.mxu0 %v1303
    %2618 = vmatpush2.bf16.xpose.msra.mxu0 %v1302
    %2619 = vmatprep.mubr.bf16.mxu0 %v2377
    %2620 = vmatmul.mubr.bf16.gmra.mxu0 %v2376
    %v2621 = vpop.f32.mrf.mxu0
    %v2622 = vadd.f32 %v2581, %v2621
    %v2623 = vpop.f32.mrf.mxu0
    %v2624 = vadd.f32 %v2583, %v2623
    %v2625 = vpop.f32.mrf.mxu0
    %v2626 = vpop.f32.mrf.mxu0
    %2627 = vdwg.mxu0
    %2628 = vmatprep.subr.bf16.mxu0 %v1289
    %2629 = vmatpush1.bf16.xpose.msra.mxu0 %v1288
    %2630 = vmatprep.subr.bf16.mxu0 %v1273
    %2631 = vmatpush1.bf16.xpose.msra.mxu0 %v1272
    %2632 = vmatprep.subr.bf16.mxu0 %v1257
    %2633 = vmatpush1.bf16.xpose.msra.mxu0 %v1256
    %2634 = vmatprep.subr.bf16.mxu0 %v1241
    %2635 = vmatpush1.bf16.xpose.msra.mxu0 %v1240
    %2636 = vmatprep.subr.bf16.mxu0 %v1225
    %2637 = vmatpush1.bf16.xpose.msra.mxu0 %v1224
    %2638 = vmatprep.subr.bf16.mxu0 %v1209
    %2639 = vmatpush1.bf16.xpose.msra.mxu0 %v1208
    %2640 = vmatprep.subr.bf16.mxu0 %v1193
    %2641 = vmatpush1.bf16.xpose.msra.mxu0 %v1192
    %2642 = vmatprep.subr.bf16.mxu0 %v1177
    %2643 = vmatpush1.bf16.xpose.msra.mxu0 %v1176
    %2644 = vmatprep.subr.bf16.mxu0 %v1417
    %2645 = vmatpush2.bf16.xpose.msra.mxu0 %v1416
    %2646 = vmatprep.subr.bf16.mxu0 %v1401
    %2647 = vmatpush2.bf16.xpose.msra.mxu0 %v1400
    %2648 = vmatprep.subr.bf16.mxu0 %v1385
    %2649 = vmatpush2.bf16.xpose.msra.mxu0 %v1384
    %2650 = vmatprep.subr.bf16.mxu0 %v1369
    %2651 = vmatpush2.bf16.xpose.msra.mxu0 %v1368
    %2652 = vmatprep.subr.bf16.mxu0 %v1353
    %2653 = vmatpush2.bf16.xpose.msra.mxu0 %v1352
    %2654 = vmatprep.subr.bf16.mxu0 %v1337
    %2655 = vmatpush2.bf16.xpose.msra.mxu0 %v1336
    %2656 = vmatprep.subr.bf16.mxu0 %v1321
    %2657 = vmatpush2.bf16.xpose.msra.mxu0 %v1320
    %2658 = vmatprep.subr.bf16.mxu0 %v1305
    %2659 = vmatpush2.bf16.xpose.msra.mxu0 %v1304
    %2660 = vmatprep.mubr.bf16.mxu0 %v2379
    %2661 = vmatmul.mubr.bf16.gmra.mxu0 %v2378
    %v2662 = vpop.f32.mrf.mxu0
    %v2663 = vadd.f32 %v2622, %v2662
    %v2664 = vpop.f32.mrf.mxu0
    %v2665 = vadd.f32 %v2624, %v2664
    %v2666 = vpop.f32.mrf.mxu0
    %v2667 = vpop.f32.mrf.mxu0
    %2668 = vdwg.mxu0
    %2669 = vmatprep.subr.bf16.mxu0 %v1291
    %2670 = vmatpush1.bf16.xpose.msra.mxu0 %v1290
    %2671 = vmatprep.subr.bf16.mxu0 %v1275
    %2672 = vmatpush1.bf16.xpose.msra.mxu0 %v1274
    %2673 = vmatprep.subr.bf16.mxu0 %v1259
    %2674 = vmatpush1.bf16.xpose.msra.mxu0 %v1258
    %2675 = vmatprep.subr.bf16.mxu0 %v1243
    %2676 = vmatpush1.bf16.xpose.msra.mxu0 %v1242
    %2677 = vmatprep.subr.bf16.mxu0 %v1227
    %2678 = vmatpush1.bf16.xpose.msra.mxu0 %v1226
    %2679 = vmatprep.subr.bf16.mxu0 %v1211
    %2680 = vmatpush1.bf16.xpose.msra.mxu0 %v1210
    %2681 = vmatprep.subr.bf16.mxu0 %v1195
    %2682 = vmatpush1.bf16.xpose.msra.mxu0 %v1194
    %2683 = vmatprep.subr.bf16.mxu0 %v1179
    %2684 = vmatpush1.bf16.xpose.msra.mxu0 %v1178
    %2685 = vmatprep.subr.bf16.mxu0 %v1419
    %2686 = vmatpush2.bf16.xpose.msra.mxu0 %v1418
    %2687 = vmatprep.subr.bf16.mxu0 %v1403
    %2688 = vmatpush2.bf16.xpose.msra.mxu0 %v1402
    %2689 = vmatprep.subr.bf16.mxu0 %v1387
    %2690 = vmatpush2.bf16.xpose.msra.mxu0 %v1386
    %2691 = vmatprep.subr.bf16.mxu0 %v1371
    %2692 = vmatpush2.bf16.xpose.msra.mxu0 %v1370
    %2693 = vmatprep.subr.bf16.mxu0 %v1355
    %2694 = vmatpush2.bf16.xpose.msra.mxu0 %v1354
    %2695 = vmatprep.subr.bf16.mxu0 %v1339
    %2696 = vmatpush2.bf16.xpose.msra.mxu0 %v1338
    %2697 = vmatprep.subr.bf16.mxu0 %v1323
    %2698 = vmatpush2.bf16.xpose.msra.mxu0 %v1322
    %2699 = vmatprep.subr.bf16.mxu0 %v1307
    %2700 = vmatpush2.bf16.xpose.msra.mxu0 %v1306
    %2701 = vmatprep.mubr.bf16.mxu0 %v2381
    %2702 = vmatmul.mubr.bf16.gmra.mxu0 %v2380
    %v2703 = vpop.f32.mrf.mxu0
    %v2704 = vadd.f32 %v2663, %v2703
    %v2705 = vpop.f32.mrf.mxu0
    %v2706 = vadd.f32 %v2665, %v2705
    %v2707 = vpop.f32.mrf.mxu0
    %v2708 = vpop.f32.mrf.mxu0
    %2709 = vdwg.mxu0
    %v2710 = vadd.f32 %v2364, %v2704
    %v2711 = vadd.f32 %v2365, %v2706
    %2712 = vst [vmem:[#allocation3] sm:$0xff] %v2710
    %2713 = vst [vmem:[#allocation3 + $0x8] sm:$0xff] %v2711
    // Predicated region
    $region46: #{tpu_custom_call.1} parent=1 // pred_check
      %p2714 = pneg %p78
    $region47: #{tpu_custom_call.1} parent=1 // pred_check_branch
      %2716 = sbr.rel (%p2714) target = $region49
    $region48: #{tpu_custom_call.1} parent=1 // pred_region
      %v2717 = vld [vmem:[#allocation3] sm:$0xff]
      %v2718 = vld [vmem:[#allocation3 + $0x8] sm:$0xff]
      %v2719 = vld [vmem:[%s4] sm:$0xff]
      %v2720 = vunpack.c.l.bf16 %v2719
      %v2721 = vunpack.c.h.bf16 %v2719
      %v2722 = vmul.f32 %v2720, %v2717
      %v2723 = vmul.f32 %v2721, %v2718
      %v2724 = vadd.f32 %v2722, %v2723
      %2725 = vadd.xlane.f32.xlu0 %v2724
      %v2726 = vpop.xlane.xlu0 %2725
      %v2727 = vrot.slane %v2726, 4
      %v2728 = vadd.f32 %v2726, %v2727
      %v2729 = vrot.slane %v2728, 2
      %v2730 = vadd.f32 %v2728, %v2729
      %v2731 = vrot.slane %v2730, 1
      %v2732 = vadd.f32 %v2730, %v2731
      %s2733 = vtos %v2732
      %v2734 = vstv %s2733
      %v2735 = vmax.f32 %v2734, 0.0
      %v2736 = vrsqrt.pop %v2735
      %v2737 = vmul.f32 %v2735, %v2736
      %vm2738 = vcmp.eq.f32.partialorder %v2735, inf
      %v2739 = vsel %vm2738, %v2735, %v2737
      %vm2740 = vcmp.eq.f32.partialorder %v2735, 0.0
      %v2741 = vand.u32 %v2735, 2147483648
      %v2742 = vsel %vm2740, %v2741, %v2739
      %v2743 = vmul.f32 %v2717, %v2717
      %v2744 = vmul.f32 %v2718, %v2718
      %v2745 = vadd.f32 %v2743, %v2744
      %2746 = vadd.xlane.f32.xlu0 %v2745
      %v2747 = vpop.xlane.xlu0 %2746
      %v2748 = vrot.slane %v2747, 4
      %v2749 = vadd.f32 %v2747, %v2748
      %v2750 = vrot.slane %v2749, 2
      %v2751 = vadd.f32 %v2749, %v2750
      %v2752 = vrot.slane %v2751, 1
      %v2753 = vadd.f32 %v2751, %v2752
      %s2754 = vtos %v2753
      %v2755 = vstv %s2754
      %v2756 = vrsqrt.pop %v2755
      %v2757 = vmul.f32 %v2755, %v2756
      %vm2758 = vcmp.eq.f32.partialorder %v2755, inf
      %v2759 = vsel %vm2758, %v2755, %v2757
      %vm2760 = vcmp.eq.f32.partialorder %v2755, 0.0
      %v2761 = vand.u32 %v2755, 2147483648
      %v2762 = vsel %vm2760, %v2761, %v2759
      %v2763 = vmax.f32 %v2762, 1e-12
      %v2764 = vrcp.pop %v2763
      %v2765 = vmul.f32 %v2742, %v2764
      %v2766 = vld [vmem:[#allocation2] sm:$0xff]
      %v2767 = vld [vmem:[#allocation2 + $0x8] sm:$0xff]
      %v2768 = vld [vmem:[#allocation2 + $0x10] sm:$0xff]
      %v2769 = vld [vmem:[#allocation2 + $0x18] sm:$0xff]
      %v2770 = vmul.f32 %v2766, %v2765
      %v2771 = vmul.f32 %v2767, %v2765
      %v2772 = vmul.f32 %v2768, %v2765
      %v2773 = vmul.f32 %v2769, %v2765
      %v2774 = vld [vmem:[#allocation10] sm:$0x3]
      %v2776 = vlaneseq
      %v2777 = vshrl.u32 %v2776, 7
      %v2778 = vsub.s32 0, %v2777
      %v2779 = vrot.slane %v2774, %v2778
      %v2780 = vlaneseq
      %v2781 = vshrl.u32 %v2780, 7
      %v2782 = vsub.s32 1, %v2781
      %v2783 = vrot.slane %v2774, %v2782
      %v2786 = vadd.f32 %v2770, %v2779
      %v2787 = vadd.f32 %v2771, %v2783
      %v2788 = vadd.f32 %v2772, %v2779
      %v2789 = vadd.f32 %v2773, %v2783
      %vm2790 = vcmp.gt.f32.partialorder %v2786, 0.0
      %vm2791 = vcmp.gt.f32.partialorder %v2787, 0.0
      %vm2792 = vcmp.gt.f32.partialorder %v2788, 0.0
      %vm2793 = vcmp.gt.f32.partialorder %v2789, 0.0
      %v2794 = vmul.f32 %v2786, 0.2
      %v2795 = vmul.f32 %v2787, 0.2
      %v2796 = vmul.f32 %v2788, 0.2
      %v2797 = vmul.f32 %v2789, 0.2
      %v2798 = vsel %vm2790, %v2786, %v2794
      %v2799 = vsel %vm2791, %v2787, %v2795
      %v2800 = vsel %vm2792, %v2788, %v2796
      %v2801 = vsel %vm2793, %v2789, %v2797
      %v2802 = vld [vmem:[#allocation11] sm:$0x3]
      %v2804 = vlaneseq
      %v2805 = vshrl.u32 %v2804, 7
      %v2806 = vsub.s32 0, %v2805
      %v2807 = vrot.slane %v2802, %v2806
      %v2808 = vlaneseq
      %v2809 = vshrl.u32 %v2808, 7
      %v2810 = vsub.s32 1, %v2809
      %v2811 = vrot.slane %v2802, %v2810
      %v2814 = vmul.f32 %v2798, %v2807
      %v2815 = vmul.f32 %v2799, %v2811
      %v2816 = vmul.f32 %v2800, %v2807
      %v2817 = vmul.f32 %v2801, %v2811
      %v2818 = vadd.f32 %v2814, %v2815
      %2819 = vadd.xlane.f32.xlu0 %v2818
      %v2820 = vpop.xlane.xlu0 %2819
      %v2821 = vadd.f32 %v2816, %v2817
      %2822 = vadd.xlane.f32.xlu0 %v2821
      %v2823 = vpop.xlane.xlu0 %2822
      %s2824 = sld [smem:[#allocation4]]
      %v2825 = vstv %s2824
      %v2826 = vadd.f32 %v2820, %v2825
      %v2827 = vadd.f32 %v2823, %v2825
      %v2828 = vsub.f32 0.0, %v2826
      %v2829 = vsub.f32 0.0, %v2827
      %v2830 = vmul.f32 %v2828, 1.442695
      %v2831 = vpow.pop %v2830
      %v2832 = vmul.f32 %v2829, 1.442695
      %v2833 = vpow.pop %v2832
      %v2834 = vadd.f32 %v2831, 1.0
      %v2835 = vadd.f32 %v2833, 1.0
      %v2836 = vrcp.pop %v2834
      %v2837 = vmul.f32 1.0, %v2836
      %v2838 = vrcp.pop %v2835
      %v2839 = vmul.f32 1.0, %v2838
      %vm2840 = vcmask 7168
      %2841 = vst.msk [vmem:[%s6] sm:$0xff] %vm2840, %v2837
      %2842 = vst.msk [vmem:[%s6 + $0x8] sm:$0xff] %vm2840, %v2839
      %2843 = vst [vmem:[#allocation13] sm:$0xff] %v2717
      %2844 = vst [vmem:[#allocation13 + $0x8] sm:$0xff] %v2718
    $region49: #{tpu_custom_call.1} parent=1 // pred_fallthru
      _
    // Predicated region
    $region50: #{tpu_custom_call.1} parent=1 // pred_check
      _
    $region51: #{tpu_custom_call.1} parent=1 // pred_check_branch
      %2846 = sbr.rel (0) target = $region53
    $region52: #{tpu_custom_call.1} parent=1 // pred_region
      _
    $region53: #{tpu_custom_call.1} parent=1 // pred_fallthru
      _
    // Predicated region
    $region54: #{tpu_custom_call.1} parent=1 // pred_check
      _
    $region55: #{tpu_custom_call.1} parent=1 // pred_check_branch
      %2848 = sbr.rel (0) target = $region57
    $region56: #{tpu_custom_call.1} parent=1 // pred_region
      %s2850 = ssub.s32 256, 256
      %2851 = vsyncadd [#allocation7], %s2850
      %s2853 = sshll.u32 [#allocation13], 4
      %s2854 = int_to_ptr.vmem [resolvable:$true] %s2853
      %2856 = dma.vmem_to_hbm [thread:$0]  %s2854, 256, %s7, [#allocation7]
    $region57: #{tpu_custom_call.1} parent=1 // pred_fallthru
      _
    // Predicated region
    $region58: #{tpu_custom_call.1} parent=1 // pred_check
      _
    $region59: #{tpu_custom_call.1} parent=1 // pred_check_branch
      %2858 = sbr.rel (0) target = $region61
    $region60: #{tpu_custom_call.1} parent=1 // pred_region
      _
    $region61: #{tpu_custom_call.1} parent=1 // pred_fallthru
      _
    // Predicated region
    $region62: #{tpu_custom_call.1} parent=1 // pred_check
      _
    $region63: #{tpu_custom_call.1} parent=1 // pred_check_branch
      %2860 = sbr.rel (0) target = $region65
    $region64: #{tpu_custom_call.1} parent=1 // pred_region
      %2861 = dma.done [#allocation7], 256
    $region65: #{tpu_custom_call.1} parent=1 // pred_fallthru
      _
    %2862 = vsyncpa [#allocation6], 1
    %2863 = vsyncpa [#allocation9], 1
    %2864 = vsyncpa [#allocation12], 1
    %2865 = vsyncpa [#allocation7], 1

</llo_original>
